<compile_context>
chip_gen: v7x
topology: tpu7x:2x2x1
jax: 0.10.0
libtpu: 0.0.40
codegen_flags: <defaults>
</compile_context>

<pallas_src>
import jax
import jax.numpy as jnp
from jax.experimental import pallas as pl
from jax.experimental.pallas import tpu as pltpu

# ----------------------------- sizes -----------------------------
X = 16          # x_space_size (conditioning vector)
Y = 32          # y_space_size (data / reconstruction)
Z = 8           # z_space_size (latent)
H = 64          # hidden width of the builder MLP
B = 256         # total batch per call
TB = 128        # batch tile (rows per grid step)

C_IN = 64       # padded input width: [x | y | eps | 0]   (X+Y+Z = 56 -> 64)
C_W = 64        # parameter-slab width (= H = widest weight column count)
C_OUT = Y + 2 * Z   # packed output width: [y_hat | mean | log_var] = 48

# row offsets inside the parameter slab (all multiples of 8 -> no sublane-shifted views)
R_EW1 = 0       # (64, 64): rows 0..47 real = cat(x,y)->H weight, rest zero
R_EB1 = 64      # (1, 64) : encoder bias 1
R_EW2 = 72      # (64, 64): cols 0..15 real = H->2Z head weight, rest zero
R_EB2 = 136     # (1, 64) : encoder bias 2 (cols 0..15 real)
R_DW1X = 144    # (64, 64): rows 0..15 real = x->H decoder weight, rest zero
R_DW1Z = 208    # (8, 64) : z->H decoder weight
R_DB1 = 216     # (1, 64) : decoder bias 1
R_DW2 = 224     # (64, 64): cols 0..31 real = H->Y weight, rest zero
R_DB2 = 288     # (1, 64) : decoder bias 2 (cols 0..31 real)
R_TOT = 296


# ----------------------------- kernel -----------------------------
def vae_forward_kernel(inp_ref, p_ref, out_ref):
    inp = inp_ref[...]                       # (TB, 64) = [x | y | eps | 0]
    eps = inp[:, X + Y:X + Y + Z]            # (TB, Z)

    # ---------- Encoder layer 1: relu(cat(x,y) @ W1 + b1) ----------
    # W1 is row-zero-padded over the eps/pad columns, so the full packed input
    # can be used directly (one MXU push, no activation slicing).
    ew1 = p_ref[R_EW1:R_EW1 + C_W, :]
    eb1 = p_ref[R_EB1:R_EB1 + 1, :]
    h_enc = jnp.dot(inp, ew1, preferred_element_type=jnp.float32) + eb1
    h_enc = jnp.maximum(h_enc, 0.0)

    # ---------- Encoder head (merged): one dot, slice mean / log_var ----------
    ew2 = p_ref[R_EW2:R_EW2 + C_W, :]
    eb2 = p_ref[R_EB2:R_EB2 + 1, :]
    enc2 = jnp.dot(h_enc, ew2, preferred_element_type=jnp.float32) + eb2
    mean = enc2[:, :Z]
    log_var = enc2[:, Z:2 * Z]

    # ---------- Reparameterization: z = mean + exp(0.5*log_var) * eps ----------
    z = mean + jnp.exp(0.5 * log_var) * eps

    # ---------- Decoder layer 1: relu(cat(x,z) @ W1 + b1) ----------
    # cat(x,z) @ W1 == x @ W1x + z @ W1z ; W1x row-zero-padded so `inp` is used directly.
    dw1x = p_ref[R_DW1X:R_DW1X + C_W, :]
    dw1z = p_ref[R_DW1Z:R_DW1Z + Z, :]
    db1 = p_ref[R_DB1:R_DB1 + 1, :]
    h_dec = jnp.dot(inp, dw1x, preferred_element_type=jnp.float32)
    h_dec += jnp.dot(z, dw1z, preferred_element_type=jnp.float32)
    h_dec += db1
    h_dec = jnp.maximum(h_dec, 0.0)

    # ---------- Decoder layer 2 ----------
    dw2 = p_ref[R_DW2:R_DW2 + C_W, :]
    db2 = p_ref[R_DB2:R_DB2 + 1, :]
    dec2 = jnp.dot(h_dec, dw2, preferred_element_type=jnp.float32) + db2

    # ---------- Packed output: [y_hat | mean | log_var], single output buffer ----------
    out_ref[:, 0:Y] = dec2[:, 0:Y].astype(out_ref.dtype)
    out_ref[:, Y:Y + Z] = mean.astype(out_ref.dtype)
    out_ref[:, Y + Z:Y + 2 * Z] = log_var.astype(out_ref.dtype)


# ----------------------------- packing helpers -----------------------------
def pack_params(raw):
    """Pack the raw (PyTorch-layout) weights into one zero-padded (R_TOT, C_W) slab."""
    ew1, eb1, ew2, eb2, dw1, db1, dw2, db2 = raw
    slab = jnp.zeros((R_TOT, C_W), jnp.float32)
    slab = slab.at[R_EW1:R_EW1 + X + Y, :H].set(ew1)       # (48, 64)
    slab = slab.at[R_EB1, :H].set(eb1)
    slab = slab.at[R_EW2:R_EW2 + H, :2 * Z].set(ew2)       # (64, 16)
    slab = slab.at[R_EB2, :2 * Z].set(eb2)
    slab = slab.at[R_DW1X:R_DW1X + X, :H].set(dw1[:X])     # x part of decoder W1
    slab = slab.at[R_DW1Z:R_DW1Z + Z, :H].set(dw1[X:])     # z part of decoder W1
    slab = slab.at[R_DB1, :H].set(db1)
    slab = slab.at[R_DW2:R_DW2 + H, :Y].set(dw2)           # (64, 32)
    slab = slab.at[R_DB2, :Y].set(db2)
    return slab


def pack_inputs(x, y, eps):
    """Pack x | y | eps into one lane-padded (B, C_IN) slab."""
    b = x.shape[0]
    inp = jnp.zeros((b, C_IN), jnp.float32)
    inp = inp.at[:, :X].set(x)
    inp = inp.at[:, X:X + Y].set(y)
    inp = inp.at[:, X + Y:X + Y + Z].set(eps)
    return inp


# ----------------------------- wrapper -----------------------------
def vae_forward(x, y, eps, param_slab):
    b = x.shape[0]
    assert b % TB == 0, "batch must be a multiple of the batch tile"
    inp = pack_inputs(x, y, eps)

    packed = pl.pallas_call(
        vae_forward_kernel,
        out_shape=jax.ShapeDtypeStruct((b, C_OUT), jnp.float32),
        grid=(b // TB,),
        in_specs=[
            pl.BlockSpec((TB, C_IN), lambda i: (i, 0)),       # batch tile of packed inputs
            pl.BlockSpec((R_TOT, C_W), lambda i: (0, 0)),     # parameter slab, VMEM-resident
        ],
        out_specs=pl.BlockSpec((TB, C_OUT), lambda i: (i, 0)),
        compiler_params=pltpu.CompilerParams(
            # batch-tile axis is independent -> shards across v7x's 2 TCs (no-op on v5e/v6e)
            dimension_semantics=("parallel",),
        ),
    )(inp, param_slab)

    y_hat = packed[:, :Y]
    mean = packed[:, Y:Y + Z]
    log_var = packed[:, Y + Z:]
    return y_hat, mean, log_var


# ----------------------------- params / reference / main -----------------------------
def init_params(key):
    ks = jax.random.split(key, 8)
    scale = 0.1
    # encoder: Linear(X+Y -> H) -> ReLU -> Linear(H -> 2Z)
    ew1 = scale * jax.random.normal(ks[0], (X + Y, H), jnp.float32)
    eb1 = scale * jax.random.normal(ks[1], (H,), jnp.float32)
    ew2 = scale * jax.random.normal(ks[2], (H, 2 * Z), jnp.float32)
    eb2 = scale * jax.random.normal(ks[3], (2 * Z,), jnp.float32)
    # decoder: Linear(X+Z -> H) -> ReLU -> Linear(H -> Y)
    dw1 = scale * jax.random.normal(ks[4], (X + Z, H), jnp.float32)
    db1 = scale * jax.random.normal(ks[5], (H,), jnp.float32)
    dw2 = scale * jax.random.normal(ks[6], (H, Y), jnp.float32)
    db2 = scale * jax.random.normal(ks[7], (Y,), jnp.float32)
    return (ew1, eb1, ew2, eb2, dw1, db1, dw2, db2)


def reference_forward(x, y, eps, raw):
    """Pure-JAX reference of the PyTorch module's forward pass."""
    ew1, eb1, ew2, eb2, dw1, db1, dw2, db2 = raw
    h = jnp.maximum(jnp.concatenate([x, y], axis=1) @ ew1 + eb1, 0.0)
    enc = h @ ew2 + eb2
    mean, log_var = enc[:, :Z], enc[:, Z:]
    z = mean + jnp.exp(0.5 * log_var) * eps
    hd = jnp.maximum(jnp.concatenate([x, z], axis=1) @ dw1 + db1, 0.0)
    return hd @ dw2 + db2, mean, log_var


if __name__ == "__main__":
    key = jax.random.PRNGKey(0)
    k_x, k_y, k_eps, k_p = jax.random.split(key, 4)

    x = jax.random.normal(k_x, (B, X), jnp.float32)
    y = jax.random.normal(k_y, (B, Y), jnp.float32)
    # TODO(synk): torch.randn_like inside forward is replaced by a deterministic,
    # host-supplied epsilon (could also be drawn in-kernel with pltpu.prng_*).
    eps = jax.random.normal(k_eps, (B, Z), jnp.float32)

    raw_params = init_params(k_p)
    param_slab = pack_params(raw_params)

    y_hat, mean, log_var = vae_forward(x, y, eps, param_slab)
    jax.block_until_ready((y_hat, mean, log_var))

    # correctness check against the pure-JAX reference
    y_ref, m_ref, lv_ref = reference_forward(x, y, eps, raw_params)
    assert jnp.allclose(y_hat, y_ref, atol=1e-4, rtol=1e-4)
    assert jnp.allclose(mean, m_ref, atol=1e-4, rtol=1e-4)
    assert jnp.allclose(log_var, lv_ref, atol=1e-4, rtol=1e-4)

    print("KERNEL_OK")
</pallas_src>

<mosaic_0001>
module attributes {stable_mosaic.version = 11 : i64} {
  func.func @vae_forward_kernel(%arg0: i32, %arg1: memref<128x64xf32, #tpu.memory_space<vmem>>, %arg2: memref<296x64xf32, #tpu.memory_space<vmem>>, %arg3: memref<128x48xf32, #tpu.memory_space<vmem>>) attributes {dimension_semantics = [#tpu.dimension_semantics<parallel>], iteration_bounds = array<i64: 2>, scalar_prefetch = 0 : i64, scratch_operands = 0 : i64, tpu.core_type = #tpu.core_type<tc>, window_params = [{transform_indices = @transform_0, window_bounds = array<i64: 128, 64>}, {pipeline_mode = #tpu.pipeline_mode<synchronous>, transform_indices = @transform_1, window_bounds = array<i64: 296, 64>}, {transform_indices = @transform_2, window_bounds = array<i64: 128, 48>}]} {
    %c0 = arith.constant 0 : index
    %c0_0 = arith.constant 0 : index
    %0 = vector.load %arg1[%c0, %c0_0] : memref<128x64xf32, #tpu.memory_space<vmem>>, vector<128x64xf32>
    %1 = vector.extract_strided_slice %0 {offsets = [0, 48], sizes = [128, 8], strides = [1, 1]} : vector<128x64xf32> to vector<128x8xf32>
    %c0_1 = arith.constant 0 : index
    %c0_2 = arith.constant 0 : index
    %2 = vector.load %arg2[%c0_1, %c0_2] : memref<296x64xf32, #tpu.memory_space<vmem>>, vector<64x64xf32>
    %c64 = arith.constant 64 : index
    %c0_3 = arith.constant 0 : index
    %3 = vector.load %arg2[%c64, %c0_3] : memref<296x64xf32, #tpu.memory_space<vmem>>, vector<1x64xf32>
    %cst = arith.constant dense<0.000000e+00> : vector<128x64xf32>
    %4 = tpu.matmul %0, %2, %cst {dimension_numbers = #tpu.dot_dimension_numbers<[1], [0], [0], [1], [0, 0, 1, 1], [], []>} : vector<128x64xf32>, vector<64x64xf32>, vector<128x64xf32> -> vector<128x64xf32>
    %5 = vector.broadcast %3 : vector<1x64xf32> to vector<128x64xf32>
    %6 = arith.addf %4, %5 : vector<128x64xf32>
    %cst_4 = arith.constant 0.000000e+00 : f32
    %7 = vector.broadcast %cst_4 : f32 to vector<128x64xf32>
    %8 = arith.maximumf %6, %7 : vector<128x64xf32>
    %c72 = arith.constant 72 : index
    %c0_5 = arith.constant 0 : index
    %9 = vector.load %arg2[%c72, %c0_5] : memref<296x64xf32, #tpu.memory_space<vmem>>, vector<64x64xf32>
    %c136 = arith.constant 136 : index
    %c0_6 = arith.constant 0 : index
    %10 = vector.load %arg2[%c136, %c0_6] : memref<296x64xf32, #tpu.memory_space<vmem>>, vector<1x64xf32>
    %cst_7 = arith.constant dense<0.000000e+00> : vector<128x64xf32>
    %11 = tpu.matmul %8, %9, %cst_7 {dimension_numbers = #tpu.dot_dimension_numbers<[1], [0], [0], [1], [0, 0, 1, 1], [], []>} : vector<128x64xf32>, vector<64x64xf32>, vector<128x64xf32> -> vector<128x64xf32>
    %12 = vector.broadcast %10 : vector<1x64xf32> to vector<128x64xf32>
    %13 = arith.addf %11, %12 : vector<128x64xf32>
    %14 = vector.extract_strided_slice %13 {offsets = [0, 0], sizes = [128, 8], strides = [1, 1]} : vector<128x64xf32> to vector<128x8xf32>
    %15 = vector.extract_strided_slice %13 {offsets = [0, 8], sizes = [128, 8], strides = [1, 1]} : vector<128x64xf32> to vector<128x8xf32>
    %cst_8 = arith.constant 5.000000e-01 : f32
    %16 = vector.broadcast %cst_8 : f32 to vector<128x8xf32>
    %17 = arith.mulf %16, %15 : vector<128x8xf32>
    %18 = math.exp %17 : vector<128x8xf32>
    %19 = arith.mulf %18, %1 : vector<128x8xf32>
    %20 = arith.addf %14, %19 : vector<128x8xf32>
    %c144 = arith.constant 144 : index
    %c0_9 = arith.constant 0 : index
    %21 = vector.load %arg2[%c144, %c0_9] : memref<296x64xf32, #tpu.memory_space<vmem>>, vector<64x64xf32>
    %c208 = arith.constant 208 : index
    %c0_10 = arith.constant 0 : index
    %22 = vector.load %arg2[%c208, %c0_10] : memref<296x64xf32, #tpu.memory_space<vmem>>, vector<8x64xf32>
    %c216 = arith.constant 216 : index
    %c0_11 = arith.constant 0 : index
    %23 = vector.load %arg2[%c216, %c0_11] : memref<296x64xf32, #tpu.memory_space<vmem>>, vector<1x64xf32>
    %cst_12 = arith.constant dense<0.000000e+00> : vector<128x64xf32>
    %24 = tpu.matmul %0, %21, %cst_12 {dimension_numbers = #tpu.dot_dimension_numbers<[1], [0], [0], [1], [0, 0, 1, 1], [], []>} : vector<128x64xf32>, vector<64x64xf32>, vector<128x64xf32> -> vector<128x64xf32>
    %cst_13 = arith.constant dense<0.000000e+00> : vector<128x64xf32>
    %25 = tpu.matmul %20, %22, %cst_13 {dimension_numbers = #tpu.dot_dimension_numbers<[1], [0], [0], [1], [0, 0, 1, 1], [], []>} : vector<128x8xf32>, vector<8x64xf32>, vector<128x64xf32> -> vector<128x64xf32>
    %26 = arith.addf %24, %25 : vector<128x64xf32>
    %27 = vector.broadcast %23 : vector<1x64xf32> to vector<128x64xf32>
    %28 = arith.addf %26, %27 : vector<128x64xf32>
    %cst_14 = arith.constant 0.000000e+00 : f32
    %29 = vector.broadcast %cst_14 : f32 to vector<128x64xf32>
    %30 = arith.maximumf %28, %29 : vector<128x64xf32>
    %c224 = arith.constant 224 : index
    %c0_15 = arith.constant 0 : index
    %31 = vector.load %arg2[%c224, %c0_15] : memref<296x64xf32, #tpu.memory_space<vmem>>, vector<64x64xf32>
    %c288 = arith.constant 288 : index
    %c0_16 = arith.constant 0 : index
    %32 = vector.load %arg2[%c288, %c0_16] : memref<296x64xf32, #tpu.memory_space<vmem>>, vector<1x64xf32>
    %cst_17 = arith.constant dense<0.000000e+00> : vector<128x64xf32>
    %33 = tpu.matmul %30, %31, %cst_17 {dimension_numbers = #tpu.dot_dimension_numbers<[1], [0], [0], [1], [0, 0, 1, 1], [], []>} : vector<128x64xf32>, vector<64x64xf32>, vector<128x64xf32> -> vector<128x64xf32>
    %34 = vector.broadcast %32 : vector<1x64xf32> to vector<128x64xf32>
    %35 = arith.addf %33, %34 : vector<128x64xf32>
    %36 = vector.extract_strided_slice %35 {offsets = [0, 0], sizes = [128, 32], strides = [1, 1]} : vector<128x64xf32> to vector<128x32xf32>
    %c0_18 = arith.constant 0 : index
    %c0_19 = arith.constant 0 : index
    %37 = vector.load %arg3[%c0_18, %c0_19] : memref<128x48xf32, #tpu.memory_space<vmem>>, vector<128x32xf32>
    tpu.vector_store %arg3[%c0_18, %c0_19], %36 {strides = array<i32>} : memref<128x48xf32, #tpu.memory_space<vmem>>, vector<128x32xf32>,
    %c0_20 = arith.constant 0 : index
    %c32 = arith.constant 32 : index
    %38 = vector.load %arg3[%c0_20, %c32] : memref<128x48xf32, #tpu.memory_space<vmem>>, vector<128x8xf32>
    tpu.vector_store %arg3[%c0_20, %c32], %14 {strides = array<i32>} : memref<128x48xf32, #tpu.memory_space<vmem>>, vector<128x8xf32>,
    %c0_21 = arith.constant 0 : index
    %c40 = arith.constant 40 : index
    %39 = vector.load %arg3[%c0_21, %c40] : memref<128x48xf32, #tpu.memory_space<vmem>>, vector<128x8xf32>
    tpu.vector_store %arg3[%c0_21, %c40], %15 {strides = array<i32>} : memref<128x48xf32, #tpu.memory_space<vmem>>, vector<128x8xf32>,
    return
  }
  func.func @transform_0(%arg0: i32) -> (i32, i32) {
    %c0_i32 = arith.constant 0 : i32
    %c0_i32_0 = arith.constant 0 : i32
    return %arg0, %c0_i32 : i32, i32
  }
  func.func @transform_1(%arg0: i32) -> (i32, i32) {
    %c0_i32 = arith.constant 0 : i32
    %c0_i32_0 = arith.constant 0 : i32
    %c0_i32_1 = arith.constant 0 : i32
    return %c0_i32, %c0_i32_0 : i32, i32
  }
  func.func @transform_2(%arg0: i32) -> (i32, i32) {
    %c0_i32 = arith.constant 0 : i32
    %c0_i32_0 = arith.constant 0 : i32
    return %arg0, %c0_i32 : i32, i32
  }
}

</mosaic_0001>

<llo_original>
// kernel: tpu_custom_call.1
$region0: #{tpu_custom_call.1}
  #allocation0 [shape = 'u32[]', space=smem, size = 0x4, offset = 0x4, fixed_abs, tag = 'smem constant byte address 0x4 - core index']
  #allocation1 [shape = 'u32[144,128]{1,0:T(1,128)}', space=vmem, size = 0x12000, scoped, tag = 'internal scratch']
  %s0 = inlined_call_operand.vmem [shape: f32[256,64], index: 0, kind: input, shape index: {}]
  %s1 = inlined_call_operand.vmem [shape: f32[296,64], index: 1, kind: input, shape index: {}]
  %s2 = inlined_call_operand.vmem [shape: f32[256,48], index: 2, kind: output, shape index: {}]
  %s3 = sld [smem:[#allocation0]]
  $region41: #{tpu_custom_call.1} parent=0
    _
  %s5 = ssub.s32 1, %s3
  %s6 = scalar_select 0, %s5, %s3
  loop: start=0, step=1, limit=4
  $region2: #{tpu_custom_call.1} parent=0 // loop_pre_header
    _
  $region3: #{tpu_custom_call.1} parent=0 // loop_header
    %s8 = sphi 0, %s12
    %p9 = scmp.ge.s32.totalorder %s8, 4
    %s18 = sphi 0, %s20
    %s21 = sphi 0, %s18
    %s22 = sphi 0, %s21
    %s38 = sphi 0, %s22
    %s42 = sphi 0, %s42
    %s44 = sphi 0, %s42
    %s45 = sphi 0, %s44
    %s59 = sphi 0, %s45
    %s65 = sphi 0, %s67
    %s68 = sphi 0, %s65
    %s69 = sphi 0, %s68
    %s85 = sphi 0, %s69
  $region4: #{tpu_custom_call.1} parent=0 // loop_header_branch
    %11 = sbr.rel (%p9) target = $region8
  $region5: #{tpu_custom_call.1} parent=0 // loop_body
    %s13 = ssub.s32 %s8, 1
    %s14 = ssub.s32 %s8, 2
    %s15 = sadd.s32 %s8, 1
    %s16 = ssub.s32 %s8, %s15
    %p17 = scmp.eq.s32.totalorder %s16, 0
    %s19 = sadd.s32 %s18, 1
    %s20 = scalar_select %p17, %s18, %s19
    %p23 = pneg %p17
    %p24 = scmp.eq.s32.totalorder %s8, 1
    %p25 = por %p23, %p24
    %p26 = scmp.ne.s32.totalorder %s18, %s21
    %p27 = scmp.eq.s32.totalorder %s8, 0
    %p28 = por %p26, %p27
    %p29 = scmp.ne.s32.totalorder %s18, %s21
    %p30 = scmp.eq.s32.totalorder %s13, 1
    %p31 = por %p29, %p30
    %p32 = scmp.ne.s32.totalorder %s21, %s22
    %p33 = scmp.eq.s32.totalorder %s13, 0
    %p34 = por %p32, %p33
    %p35 = scmp.ne.s32.totalorder %s21, %s22
    %p36 = scmp.eq.s32.totalorder %s14, 1
    %p37 = por %p35, %p36
    %p39 = scmp.ne.s32.totalorder %s22, %s38
    %p40 = scmp.eq.s32.totalorder %s14, 0
    %p41 = por %p39, %p40
    %s43 = sadd.s32 %s42, 1
    %p46 = scmp.eq.s32.totalorder %s8, 1
    %p47 = scmp.ne.s32.totalorder %s42, %s44
    %p48 = scmp.eq.s32.totalorder %s8, 0
    %p49 = por %p47, %p48
    %p50 = scmp.ne.s32.totalorder %s42, %s44
    %p51 = scmp.eq.s32.totalorder %s13, 1
    %p52 = por %p50, %p51
    %p53 = scmp.ne.s32.totalorder %s44, %s45
    %p54 = scmp.eq.s32.totalorder %s13, 0
    %p55 = por %p53, %p54
    %p56 = scmp.ne.s32.totalorder %s44, %s45
    %p57 = scmp.eq.s32.totalorder %s14, 1
    %p58 = por %p56, %p57
    %p60 = scmp.ne.s32.totalorder %s45, %s59
    %p61 = scmp.eq.s32.totalorder %s14, 0
    %p62 = por %p60, %p61
    %s63 = ssub.s32 %s8, %s15
    %p64 = scmp.eq.s32.totalorder %s63, 0
    %s66 = sadd.s32 %s65, 1
    %s67 = scalar_select %p64, %s65, %s66
    %p70 = pneg %p64
    %p71 = scmp.eq.s32.totalorder %s8, 1
    %p72 = por %p70, %p71
    %p73 = scmp.ne.s32.totalorder %s65, %s68
    %p74 = scmp.eq.s32.totalorder %s8, 0
    %p75 = por %p73, %p74
    %p76 = scmp.ne.s32.totalorder %s65, %s68
    %p77 = scmp.eq.s32.totalorder %s13, 1
    %p78 = por %p76, %p77
    %p79 = scmp.ne.s32.totalorder %s68, %s69
    %p80 = scmp.eq.s32.totalorder %s13, 0
    %p81 = por %p79, %p80
    %p82 = scmp.ne.s32.totalorder %s68, %s69
    %p83 = scmp.eq.s32.totalorder %s14, 1
    %p84 = por %p82, %p83
    %p86 = scmp.ne.s32.totalorder %s69, %s85
    %p87 = scmp.eq.s32.totalorder %s14, 0
    %p88 = por %p86, %p87
    %p89 = scmp.le.s32.totalorder 1, %s8
    %p90 = scmp.lt.s32.totalorder %s8, 3
    %p91 = pnand %p89, %p90
    %p92 = pneg %p91
    // Predicated region
    $region9: #{tpu_custom_call.1} parent=5 // pred_check
      _
    $region10: #{tpu_custom_call.1} parent=5 // pred_check_branch
      %94 = sbr.rel (%p91) target = $region12
    $region11: #{tpu_custom_call.1} parent=5 // pred_region
      %s95 = ssub.s32 %s8, 1
      // Predicated region
      $region13: #{tpu_custom_call.1} parent=11 // pred_check
        %p96 = pneg %p55
      $region14: #{tpu_custom_call.1} parent=11 // pred_check_branch
        %98 = sbr.rel (%p96) target = $region16
      $region15: #{tpu_custom_call.1} parent=11 // pred_region
        _
      $region16: #{tpu_custom_call.1} parent=11 // pred_fallthru
        _
    $region12: #{tpu_custom_call.1} parent=5 // pred_fallthru
      _
    %p99 = scmp.lt.s32.totalorder %s8, 2
    // Predicated region
    $region17: #{tpu_custom_call.1} parent=5 // pred_check
      %p100 = pneg %p99
    $region18: #{tpu_custom_call.1} parent=5 // pred_check_branch
      %102 = sbr.rel (%p100) target = $region20
    $region19: #{tpu_custom_call.1} parent=5 // pred_region
      // Predicated region
      $region21: #{tpu_custom_call.1} parent=19 // pred_check
        %p103 = pneg %p28
      $region22: #{tpu_custom_call.1} parent=19 // pred_check_branch
        %105 = sbr.rel (%p103) target = $region24
      $region23: #{tpu_custom_call.1} parent=19 // pred_region
        %s106 = smul.u32 16, %s8
        %p107 = scmp.lt.s32.totalorder %s106, 31
        %s108 = scalar_select %p107, %s106, 31
        %s109 = smul.addr %s108, 8
        %s110 = scalar_lea.vmem %s0, %s109
        %s111 = smul.u32 16, %s8
      $region24: #{tpu_custom_call.1} parent=19 // pred_fallthru
        _
    $region20: #{tpu_custom_call.1} parent=5 // pred_fallthru
      _
    %p112 = scmp.le.s32.totalorder 1, %s8
    %p113 = scmp.lt.s32.totalorder %s8, 3
    %p114 = pnand %p112, %p113
    %p115 = pneg %p114
    // Predicated region
    $region25: #{tpu_custom_call.1} parent=5 // pred_check
      _
    $region26: #{tpu_custom_call.1} parent=5 // pred_check_branch
      %117 = sbr.rel (%p114) target = $region28
    $region27: #{tpu_custom_call.1} parent=5 // pred_region
      %s118 = ssub.s32 %s8, 1
      %s119 = smul.u32 16, %s13
      %p120 = scmp.lt.s32.totalorder %s119, 31
      %s121 = scalar_select %p120, %s119, 31
      %s122 = smul.addr %s121, 8
      %s123 = scalar_lea.vmem %s0, %s122
      %p124 = pneg %p34
      %p125 = pneg %p31
      %p126 = pneg %p55
      %p127 = pneg %p52
      %p128 = pneg %p81
      %p129 = pneg %p78
      %s130 = smul.u32 16, %s13
      %p131 = scmp.lt.s32.totalorder %s130, 31
      %s132 = scalar_select %p131, %s130, 31
      %s133 = smul.addr %s132, 8
      %s134 = scalar_lea.vmem %s2, %s133
      %s135 = smul.u32 16, %s13
      %p136 = scmp.lt.s32.totalorder %s135, 31
      %s137 = scalar_select %p136, %s135, 31
      %s138 = smul.addr %s137, 8
      %s139 = scalar_lea.vmem %s0, %s138
      %s140 = smul.u32 16, %s13
      %s141 = smul.u32 16, %s13
      %p142 = scmp.lt.s32.totalorder %s141, 31
      %s143 = scalar_select %p142, %s141, 31
      %s144 = smul.addr %s143, 8
      %s145 = scalar_lea.vmem %s2, %s144
      %s146 = smul.u32 16, %s13
      %v147 = vld [vmem:[%s139] sm:$0xff]
      %v148 = vld [vmem:[%s139 + $0x8] sm:$0xff]
      %v149 = vld [vmem:[%s139 + $0x10] sm:$0xff]
      %v150 = vld [vmem:[%s139 + $0x18] sm:$0xff]
      %v151 = vld [vmem:[%s139 + $0x20] sm:$0xff]
      %v152 = vld [vmem:[%s139 + $0x28] sm:$0xff]
      %v153 = vld [vmem:[%s139 + $0x30] sm:$0xff]
      %v154 = vld [vmem:[%s139 + $0x38] sm:$0xff]
      %v155 = vld [vmem:[%s139 + $0x40] sm:$0xff]
      %v156 = vld [vmem:[%s139 + $0x48] sm:$0xff]
      %v157 = vld [vmem:[%s139 + $0x50] sm:$0xff]
      %v158 = vld [vmem:[%s139 + $0x58] sm:$0xff]
      %v159 = vld [vmem:[%s139 + $0x60] sm:$0xff]
      %v160 = vld [vmem:[%s139 + $0x68] sm:$0xff]
      %v161 = vld [vmem:[%s139 + $0x70] sm:$0xff]
      %v162 = vld [vmem:[%s139 + $0x78] sm:$0xff]
      %v163 = vld [vmem:[%s1] sm:$0xff]
      %v164 = vld [vmem:[%s1 + $0x8] sm:$0xff]
      %v165 = vld [vmem:[%s1 + $0x10] sm:$0xff]
      %v166 = vld [vmem:[%s1 + $0x18] sm:$0xff]
      %v167 = vld [vmem:[%s1 + $0x20] sm:$0xff]
      %v168 = vld [vmem:[%s1 + $0x28] sm:$0xff]
      %v169 = vld [vmem:[%s1 + $0x30] sm:$0xff]
      %v170 = vld [vmem:[%s1 + $0x38] sm:$0xff]
      %v171 = vld [vmem:[%s1 + $0x40] sm:$0x1]
      %v172 = vlaneseq
      %v173 = vshrl.u32 %v172, 7
      %v174 = vsub.s32 0, %v173
      %v175 = vrot.slane %v171, %v174
      %vm176 = vcmask 523264
      %v178 = vsel %vm176, %v147, 0
      %v181 = vsel %vm176, %v148, 0
      %v184 = vsel %vm176, %v149, 0
      %v187 = vsel %vm176, %v150, 0
      %v190 = vsel %vm176, %v151, 0
      %v193 = vsel %vm176, %v152, 0
      %v196 = vsel %vm176, %v153, 0
      %v199 = vsel %vm176, %v154, 0
      %v202 = vsel %vm176, %v155, 0
      %v205 = vsel %vm176, %v156, 0
      %v208 = vsel %vm176, %v157, 0
      %v211 = vsel %vm176, %v158, 0
      %v214 = vsel %vm176, %v159, 0
      %v217 = vsel %vm176, %v160, 0
      %v220 = vsel %vm176, %v161, 0
      %v223 = vsel %vm176, %v162, 0
      %225 = vmatprep.subr.mxu0 0.0
      %226 = vmatpush1.msra.mxu0 %v163
      %227 = vmatprep.subr.mxu0 0.0
      %228 = vmatpush1.msra.mxu0 %v164
      %229 = vmatprep.subr.mxu0 0.0
      %230 = vmatpush1.msra.mxu0 %v165
      %231 = vmatprep.subr.mxu0 0.0
      %232 = vmatpush1.msra.mxu0 %v166
      %233 = vmatprep.subr.mxu0 0.0
      %234 = vmatpush1.msra.mxu0 %v167
      %235 = vmatprep.subr.mxu0 0.0
      %236 = vmatpush1.msra.mxu0 %v168
      %237 = vmatprep.subr.mxu0 0.0
      %238 = vmatpush1.msra.mxu0 %v169
      %239 = vmatprep.subr.mxu0 0.0
      %240 = vmatpush1.msra.mxu0 %v170
      %241 = vmatprep.subr.mxu0 0.0
      %242 = vmatpush1.msra.mxu0 0.0
      %243 = vmatprep.subr.mxu0 0.0
      %244 = vmatpush1.msra.mxu0 0.0
      %245 = vmatprep.subr.mxu0 0.0
      %246 = vmatpush1.msra.mxu0 0.0
      %247 = vmatprep.subr.mxu0 0.0
      %248 = vmatpush1.msra.mxu0 0.0
      %249 = vmatprep.subr.mxu0 0.0
      %250 = vmatpush1.msra.mxu0 0.0
      %251 = vmatprep.subr.mxu0 0.0
      %252 = vmatpush1.msra.mxu0 0.0
      %253 = vmatprep.subr.mxu0 0.0
      %254 = vmatpush1.msra.mxu0 0.0
      %255 = vmatprep.subr.mxu0 0.0
      %256 = vmatpush1.msra.mxu0 0.0
      %257 = vmatprep.subr.mxu0 0.0
      %258 = vmatpush1.msra.mxu0 0.0
      %259 = vmatprep.subr.mxu0 0.0
      %260 = vmatpush1.msra.mxu0 0.0
      %261 = vmatprep.subr.mxu0 0.0
      %262 = vmatpush1.msra.mxu0 0.0
      %263 = vmatprep.subr.mxu0 0.0
      %264 = vmatpush1.msra.mxu0 0.0
      %265 = vmatprep.subr.mxu0 0.0
      %266 = vmatpush1.msra.mxu0 0.0
      %267 = vmatprep.subr.mxu0 0.0
      %268 = vmatpush1.msra.mxu0 0.0
      %269 = vmatprep.subr.mxu0 0.0
      %270 = vmatpush1.msra.mxu0 0.0
      %271 = vmatprep.subr.mxu0 0.0
      %272 = vmatpush1.msra.mxu0 0.0
      %273 = vmatprep.subr.mxu0 0.0
      %274 = vmatpush1.msra.mxu0 0.0
      %275 = vmatprep.subr.mxu0 0.0
      %276 = vmatpush1.msra.mxu0 0.0
      %277 = vmatprep.subr.mxu0 0.0
      %278 = vmatpush1.msra.mxu0 0.0
      %279 = vmatprep.subr.mxu0 0.0
      %280 = vmatpush1.msra.mxu0 0.0
      %281 = vmatprep.subr.mxu0 0.0
      %282 = vmatpush1.msra.mxu0 0.0
      %283 = vmatprep.subr.mxu0 0.0
      %284 = vmatpush1.msra.mxu0 0.0
      %285 = vmatprep.subr.mxu0 0.0
      %286 = vmatpush1.msra.mxu0 0.0
      %287 = vmatprep.subr.mxu0 0.0
      %288 = vmatpush1.msra.mxu0 0.0
      %289 = vmatprep.mubr.f32.mxu0 0.0
      %290 = vmatmul.mubr.f32.gmra.mrb[0].mxu0 %v178
      %v291 = vpop.f32.mrb[0].mxu0
      %v292 = vadd.f32 %v175, %v291
      %v293 = vpop.f32.mrb[0].mxu0
      %294 = vmatprep.mubr.f32.mxu0 0.0
      %295 = vmatmul.mubr.f32.gmra.mrb[0].mxu0 %v181
      %v296 = vpop.f32.mrb[0].mxu0
      %v297 = vadd.f32 %v175, %v296
      %v298 = vpop.f32.mrb[0].mxu0
      %299 = vmatprep.mubr.f32.mxu0 0.0
      %300 = vmatmul.mubr.f32.gmra.mrb[0].mxu0 %v184
      %v301 = vpop.f32.mrb[0].mxu0
      %v302 = vadd.f32 %v175, %v301
      %v303 = vpop.f32.mrb[0].mxu0
      %304 = vmatprep.mubr.f32.mxu0 0.0
      %305 = vmatmul.mubr.f32.gmra.mrb[0].mxu0 %v187
      %v306 = vpop.f32.mrb[0].mxu0
      %v307 = vadd.f32 %v175, %v306
      %v308 = vpop.f32.mrb[0].mxu0
      %309 = vmatprep.mubr.f32.mxu0 0.0
      %310 = vmatmul.mubr.f32.gmra.mrb[0].mxu0 %v190
      %v311 = vpop.f32.mrb[0].mxu0
      %v312 = vadd.f32 %v175, %v311
      %v313 = vpop.f32.mrb[0].mxu0
      %314 = vmatprep.mubr.f32.mxu0 0.0
      %315 = vmatmul.mubr.f32.gmra.mrb[0].mxu0 %v193
      %v316 = vpop.f32.mrb[0].mxu0
      %v317 = vadd.f32 %v175, %v316
      %v318 = vpop.f32.mrb[0].mxu0
      %319 = vmatprep.mubr.f32.mxu0 0.0
      %320 = vmatmul.mubr.f32.gmra.mrb[0].mxu0 %v196
      %v321 = vpop.f32.mrb[0].mxu0
      %v322 = vadd.f32 %v175, %v321
      %v323 = vpop.f32.mrb[0].mxu0
      %324 = vmatprep.mubr.f32.mxu0 0.0
      %325 = vmatmul.mubr.f32.gmra.mrb[0].mxu0 %v199
      %v326 = vpop.f32.mrb[0].mxu0
      %v327 = vadd.f32 %v175, %v326
      %v328 = vpop.f32.mrb[0].mxu0
      %329 = vmatprep.mubr.f32.mxu0 0.0
      %330 = vmatmul.mubr.f32.gmra.mrb[0].mxu0 %v202
      %v331 = vpop.f32.mrb[0].mxu0
      %v332 = vadd.f32 %v175, %v331
      %v333 = vpop.f32.mrb[0].mxu0
      %334 = vmatprep.mubr.f32.mxu0 0.0
      %335 = vmatmul.mubr.f32.gmra.mrb[0].mxu0 %v205
      %v336 = vpop.f32.mrb[0].mxu0
      %v337 = vadd.f32 %v175, %v336
      %v338 = vpop.f32.mrb[0].mxu0
      %339 = vmatprep.mubr.f32.mxu0 0.0
      %340 = vmatmul.mubr.f32.gmra.mrb[0].mxu0 %v208
      %v341 = vpop.f32.mrb[0].mxu0
      %v342 = vadd.f32 %v175, %v341
      %v343 = vpop.f32.mrb[0].mxu0
      %344 = vmatprep.mubr.f32.mxu0 0.0
      %345 = vmatmul.mubr.f32.gmra.mrb[0].mxu0 %v211
      %v346 = vpop.f32.mrb[0].mxu0
      %v347 = vadd.f32 %v175, %v346
      %v348 = vpop.f32.mrb[0].mxu0
      %349 = vmatprep.mubr.f32.mxu0 0.0
      %350 = vmatmul.mubr.f32.gmra.mrb[0].mxu0 %v214
      %v351 = vpop.f32.mrb[0].mxu0
      %v352 = vadd.f32 %v175, %v351
      %v353 = vpop.f32.mrb[0].mxu0
      %354 = vmatprep.mubr.f32.mxu0 0.0
      %355 = vmatmul.mubr.f32.gmra.mrb[0].mxu0 %v217
      %v356 = vpop.f32.mrb[0].mxu0
      %v357 = vadd.f32 %v175, %v356
      %v358 = vpop.f32.mrb[0].mxu0
      %359 = vmatprep.mubr.f32.mxu0 0.0
      %360 = vmatmul.mubr.f32.gmra.mrb[0].mxu0 %v220
      %v361 = vpop.f32.mrb[0].mxu0
      %v362 = vadd.f32 %v175, %v361
      %v363 = vpop.f32.mrb[0].mxu0
      %364 = vmatprep.mubr.f32.mxu0 0.0
      %365 = vmatmul.mubr.f32.gmra.mrb[0].mxu0 %v223
      %v366 = vpop.f32.mrb[0].mxu0
      %v367 = vadd.f32 %v175, %v366
      %v368 = vpop.f32.mrb[0].mxu0
      %369 = vdwg.mxu0
      %v370 = vmax.f32 %v292, 0.0
      %v371 = vmax.f32 %v297, 0.0
      %v372 = vmax.f32 %v302, 0.0
      %v373 = vmax.f32 %v307, 0.0
      %v374 = vmax.f32 %v312, 0.0
      %v375 = vmax.f32 %v317, 0.0
      %v376 = vmax.f32 %v322, 0.0
      %v377 = vmax.f32 %v327, 0.0
      %v378 = vmax.f32 %v332, 0.0
      %v379 = vmax.f32 %v337, 0.0
      %v380 = vmax.f32 %v342, 0.0
      %v381 = vmax.f32 %v347, 0.0
      %v382 = vmax.f32 %v352, 0.0
      %v383 = vmax.f32 %v357, 0.0
      %v384 = vmax.f32 %v362, 0.0
      %v385 = vmax.f32 %v367, 0.0
      %v386 = vld [vmem:[%s1 + $0x48] sm:$0xff]
      %v387 = vld [vmem:[%s1 + $0x50] sm:$0xff]
      %v388 = vld [vmem:[%s1 + $0x58] sm:$0xff]
      %v389 = vld [vmem:[%s1 + $0x60] sm:$0xff]
      %v390 = vld [vmem:[%s1 + $0x68] sm:$0xff]
      %v391 = vld [vmem:[%s1 + $0x70] sm:$0xff]
      %v392 = vld [vmem:[%s1 + $0x78] sm:$0xff]
      %v393 = vld [vmem:[%s1 + $0x80] sm:$0xff]
      %v394 = vld [vmem:[%s1 + $0x88] sm:$0x1]
      %v395 = vlaneseq
      %v396 = vshrl.u32 %v395, 7
      %v397 = vsub.s32 0, %v396
      %v398 = vrot.slane %v394, %v397
      %v400 = vsel %vm176, %v370, 0
      %v403 = vsel %vm176, %v371, 0
      %v406 = vsel %vm176, %v372, 0
      %v409 = vsel %vm176, %v373, 0
      %v412 = vsel %vm176, %v374, 0
      %v415 = vsel %vm176, %v375, 0
      %v418 = vsel %vm176, %v376, 0
      %v421 = vsel %vm176, %v377, 0
      %v424 = vsel %vm176, %v378, 0
      %v427 = vsel %vm176, %v379, 0
      %v430 = vsel %vm176, %v380, 0
      %v433 = vsel %vm176, %v381, 0
      %v436 = vsel %vm176, %v382, 0
      %v439 = vsel %vm176, %v383, 0
      %v442 = vsel %vm176, %v384, 0
      %v445 = vsel %vm176, %v385, 0
      %447 = vmatprep.subr.mxu0 0.0
      %448 = vmatpush1.msra.mxu0 %v386
      %449 = vmatprep.subr.mxu0 0.0
      %450 = vmatpush1.msra.mxu0 %v387
      %451 = vmatprep.subr.mxu0 0.0
      %452 = vmatpush1.msra.mxu0 %v388
      %453 = vmatprep.subr.mxu0 0.0
      %454 = vmatpush1.msra.mxu0 %v389
      %455 = vmatprep.subr.mxu0 0.0
      %456 = vmatpush1.msra.mxu0 %v390
      %457 = vmatprep.subr.mxu0 0.0
      %458 = vmatpush1.msra.mxu0 %v391
      %459 = vmatprep.subr.mxu0 0.0
      %460 = vmatpush1.msra.mxu0 %v392
      %461 = vmatprep.subr.mxu0 0.0
      %462 = vmatpush1.msra.mxu0 %v393
      %463 = vmatprep.subr.mxu0 0.0
      %464 = vmatpush1.msra.mxu0 0.0
      %465 = vmatprep.subr.mxu0 0.0
      %466 = vmatpush1.msra.mxu0 0.0
      %467 = vmatprep.subr.mxu0 0.0
      %468 = vmatpush1.msra.mxu0 0.0
      %469 = vmatprep.subr.mxu0 0.0
      %470 = vmatpush1.msra.mxu0 0.0
      %471 = vmatprep.subr.mxu0 0.0
      %472 = vmatpush1.msra.mxu0 0.0
      %473 = vmatprep.subr.mxu0 0.0
      %474 = vmatpush1.msra.mxu0 0.0
      %475 = vmatprep.subr.mxu0 0.0
      %476 = vmatpush1.msra.mxu0 0.0
      %477 = vmatprep.subr.mxu0 0.0
      %478 = vmatpush1.msra.mxu0 0.0
      %479 = vmatprep.subr.mxu0 0.0
      %480 = vmatpush1.msra.mxu0 0.0
      %481 = vmatprep.subr.mxu0 0.0
      %482 = vmatpush1.msra.mxu0 0.0
      %483 = vmatprep.subr.mxu0 0.0
      %484 = vmatpush1.msra.mxu0 0.0
      %485 = vmatprep.subr.mxu0 0.0
      %486 = vmatpush1.msra.mxu0 0.0
      %487 = vmatprep.subr.mxu0 0.0
      %488 = vmatpush1.msra.mxu0 0.0
      %489 = vmatprep.subr.mxu0 0.0
      %490 = vmatpush1.msra.mxu0 0.0
      %491 = vmatprep.subr.mxu0 0.0
      %492 = vmatpush1.msra.mxu0 0.0
      %493 = vmatprep.subr.mxu0 0.0
      %494 = vmatpush1.msra.mxu0 0.0
      %495 = vmatprep.subr.mxu0 0.0
      %496 = vmatpush1.msra.mxu0 0.0
      %497 = vmatprep.subr.mxu0 0.0
      %498 = vmatpush1.msra.mxu0 0.0
      %499 = vmatprep.subr.mxu0 0.0
      %500 = vmatpush1.msra.mxu0 0.0
      %501 = vmatprep.subr.mxu0 0.0
      %502 = vmatpush1.msra.mxu0 0.0
      %503 = vmatprep.subr.mxu0 0.0
      %504 = vmatpush1.msra.mxu0 0.0
      %505 = vmatprep.subr.mxu0 0.0
      %506 = vmatpush1.msra.mxu0 0.0
      %507 = vmatprep.subr.mxu0 0.0
      %508 = vmatpush1.msra.mxu0 0.0
      %509 = vmatprep.subr.mxu0 0.0
      %510 = vmatpush1.msra.mxu0 0.0
      %511 = vmatprep.mubr.f32.mxu0 0.0
      %512 = vmatmul.mubr.f32.gmra.mrb[0].mxu0 %v400
      %v513 = vpop.f32.mrb[0].mxu0
      %v514 = vadd.f32 %v398, %v513
      %v515 = vpop.f32.mrb[0].mxu0
      %516 = vmatprep.mubr.f32.mxu0 0.0
      %517 = vmatmul.mubr.f32.gmra.mrb[0].mxu0 %v403
      %v518 = vpop.f32.mrb[0].mxu0
      %v519 = vadd.f32 %v398, %v518
      %v520 = vpop.f32.mrb[0].mxu0
      %521 = vmatprep.mubr.f32.mxu0 0.0
      %522 = vmatmul.mubr.f32.gmra.mrb[0].mxu0 %v406
      %v523 = vpop.f32.mrb[0].mxu0
      %v524 = vadd.f32 %v398, %v523
      %v525 = vpop.f32.mrb[0].mxu0
      %526 = vmatprep.mubr.f32.mxu0 0.0
      %527 = vmatmul.mubr.f32.gmra.mrb[0].mxu0 %v409
      %v528 = vpop.f32.mrb[0].mxu0
      %v529 = vadd.f32 %v398, %v528
      %v530 = vpop.f32.mrb[0].mxu0
      %531 = vmatprep.mubr.f32.mxu0 0.0
      %532 = vmatmul.mubr.f32.gmra.mrb[0].mxu0 %v412
      %v533 = vpop.f32.mrb[0].mxu0
      %v534 = vadd.f32 %v398, %v533
      %v535 = vpop.f32.mrb[0].mxu0
      %536 = vmatprep.mubr.f32.mxu0 0.0
      %537 = vmatmul.mubr.f32.gmra.mrb[0].mxu0 %v415
      %v538 = vpop.f32.mrb[0].mxu0
      %v539 = vadd.f32 %v398, %v538
      %v540 = vpop.f32.mrb[0].mxu0
      %541 = vmatprep.mubr.f32.mxu0 0.0
      %542 = vmatmul.mubr.f32.gmra.mrb[0].mxu0 %v418
      %v543 = vpop.f32.mrb[0].mxu0
      %v544 = vadd.f32 %v398, %v543
      %v545 = vpop.f32.mrb[0].mxu0
      %546 = vmatprep.mubr.f32.mxu0 0.0
      %547 = vmatmul.mubr.f32.gmra.mrb[0].mxu0 %v421
      %v548 = vpop.f32.mrb[0].mxu0
      %v549 = vadd.f32 %v398, %v548
      %v550 = vpop.f32.mrb[0].mxu0
      %551 = vmatprep.mubr.f32.mxu0 0.0
      %552 = vmatmul.mubr.f32.gmra.mrb[0].mxu0 %v424
      %v553 = vpop.f32.mrb[0].mxu0
      %v554 = vadd.f32 %v398, %v553
      %v555 = vpop.f32.mrb[0].mxu0
      %556 = vmatprep.mubr.f32.mxu0 0.0
      %557 = vmatmul.mubr.f32.gmra.mrb[0].mxu0 %v427
      %v558 = vpop.f32.mrb[0].mxu0
      %v559 = vadd.f32 %v398, %v558
      %v560 = vpop.f32.mrb[0].mxu0
      %561 = vmatprep.mubr.f32.mxu0 0.0
      %562 = vmatmul.mubr.f32.gmra.mrb[0].mxu0 %v430
      %v563 = vpop.f32.mrb[0].mxu0
      %v564 = vadd.f32 %v398, %v563
      %v565 = vpop.f32.mrb[0].mxu0
      %566 = vmatprep.mubr.f32.mxu0 0.0
      %567 = vmatmul.mubr.f32.gmra.mrb[0].mxu0 %v433
      %v568 = vpop.f32.mrb[0].mxu0
      %v569 = vadd.f32 %v398, %v568
      %v570 = vpop.f32.mrb[0].mxu0
      %571 = vmatprep.mubr.f32.mxu0 0.0
      %572 = vmatmul.mubr.f32.gmra.mrb[0].mxu0 %v436
      %v573 = vpop.f32.mrb[0].mxu0
      %v574 = vadd.f32 %v398, %v573
      %v575 = vpop.f32.mrb[0].mxu0
      %576 = vmatprep.mubr.f32.mxu0 0.0
      %577 = vmatmul.mubr.f32.gmra.mrb[0].mxu0 %v439
      %v578 = vpop.f32.mrb[0].mxu0
      %v579 = vadd.f32 %v398, %v578
      %v580 = vpop.f32.mrb[0].mxu0
      %581 = vmatprep.mubr.f32.mxu0 0.0
      %582 = vmatmul.mubr.f32.gmra.mrb[0].mxu0 %v442
      %v583 = vpop.f32.mrb[0].mxu0
      %v584 = vadd.f32 %v398, %v583
      %v585 = vpop.f32.mrb[0].mxu0
      %586 = vmatprep.mubr.f32.mxu0 0.0
      %587 = vmatmul.mubr.f32.gmra.mrb[0].mxu0 %v445
      %v588 = vpop.f32.mrb[0].mxu0
      %v589 = vadd.f32 %v398, %v588
      %v590 = vpop.f32.mrb[0].mxu0
      %591 = vdwg.mxu0
      %v592 = vmul.f32 %v514, 0.5
      %v593 = vmul.f32 %v519, 0.5
      %v594 = vmul.f32 %v524, 0.5
      %v595 = vmul.f32 %v529, 0.5
      %v596 = vmul.f32 %v534, 0.5
      %v597 = vmul.f32 %v539, 0.5
      %v598 = vmul.f32 %v544, 0.5
      %v599 = vmul.f32 %v549, 0.5
      %v600 = vmul.f32 %v554, 0.5
      %v601 = vmul.f32 %v559, 0.5
      %v602 = vmul.f32 %v564, 0.5
      %v603 = vmul.f32 %v569, 0.5
      %v604 = vmul.f32 %v574, 0.5
      %v605 = vmul.f32 %v579, 0.5
      %v606 = vmul.f32 %v584, 0.5
      %v607 = vmul.f32 %v589, 0.5
      %v608 = vmul.f32 %v592, 1.442695
      %v609 = vpow.pop %v608
      %v610 = vmul.f32 %v593, 1.442695
      %v611 = vpow.pop %v610
      %v612 = vmul.f32 %v594, 1.442695
      %v613 = vpow.pop %v612
      %v614 = vmul.f32 %v595, 1.442695
      %v615 = vpow.pop %v614
      %v616 = vmul.f32 %v596, 1.442695
      %v617 = vpow.pop %v616
      %v618 = vmul.f32 %v597, 1.442695
      %v619 = vpow.pop %v618
      %v620 = vmul.f32 %v598, 1.442695
      %v621 = vpow.pop %v620
      %v622 = vmul.f32 %v599, 1.442695
      %v623 = vpow.pop %v622
      %v624 = vmul.f32 %v600, 1.442695
      %v625 = vpow.pop %v624
      %v626 = vmul.f32 %v601, 1.442695
      %v627 = vpow.pop %v626
      %v628 = vmul.f32 %v602, 1.442695
      %v629 = vpow.pop %v628
      %v630 = vmul.f32 %v603, 1.442695
      %v631 = vpow.pop %v630
      %v632 = vmul.f32 %v604, 1.442695
      %v633 = vpow.pop %v632
      %v634 = vmul.f32 %v605, 1.442695
      %v635 = vpow.pop %v634
      %v636 = vmul.f32 %v606, 1.442695
      %v637 = vpow.pop %v636
      %v638 = vmul.f32 %v607, 1.442695
      %v639 = vpow.pop %v638
      %640 = vrot.lane.b32.xlu0 %v147, 88
      %v641 = vpop.permute.xlu0 %640
      %642 = vrot.lane.b32.xlu0 %v148, 88
      %v643 = vpop.permute.xlu0 %642
      %644 = vrot.lane.b32.xlu0 %v149, 88
      %v645 = vpop.permute.xlu0 %644
      %646 = vrot.lane.b32.xlu0 %v150, 88
      %v647 = vpop.permute.xlu0 %646
      %648 = vrot.lane.b32.xlu0 %v151, 88
      %v649 = vpop.permute.xlu0 %648
      %650 = vrot.lane.b32.xlu0 %v152, 88
      %v651 = vpop.permute.xlu0 %650
      %652 = vrot.lane.b32.xlu0 %v153, 88
      %v653 = vpop.permute.xlu0 %652
      %654 = vrot.lane.b32.xlu0 %v154, 88
      %v655 = vpop.permute.xlu0 %654
      %656 = vrot.lane.b32.xlu0 %v155, 88
      %v657 = vpop.permute.xlu0 %656
      %658 = vrot.lane.b32.xlu0 %v156, 88
      %v659 = vpop.permute.xlu0 %658
      %660 = vrot.lane.b32.xlu0 %v157, 88
      %v661 = vpop.permute.xlu0 %660
      %662 = vrot.lane.b32.xlu0 %v158, 88
      %v663 = vpop.permute.xlu0 %662
      %664 = vrot.lane.b32.xlu0 %v159, 88
      %v665 = vpop.permute.xlu0 %664
      %666 = vrot.lane.b32.xlu0 %v160, 88
      %v667 = vpop.permute.xlu0 %666
      %668 = vrot.lane.b32.xlu0 %v161, 88
      %v669 = vpop.permute.xlu0 %668
      %670 = vrot.lane.b32.xlu0 %v162, 88
      %v671 = vpop.permute.xlu0 %670
      %v688 = vmul.f32 %v609, %v641
      %v689 = vmul.f32 %v611, %v643
      %v690 = vmul.f32 %v613, %v645
      %v691 = vmul.f32 %v615, %v647
      %v692 = vmul.f32 %v617, %v649
      %v693 = vmul.f32 %v619, %v651
      %v694 = vmul.f32 %v621, %v653
      %v695 = vmul.f32 %v623, %v655
      %v696 = vmul.f32 %v625, %v657
      %v697 = vmul.f32 %v627, %v659
      %v698 = vmul.f32 %v629, %v661
      %v699 = vmul.f32 %v631, %v663
      %v700 = vmul.f32 %v633, %v665
      %v701 = vmul.f32 %v635, %v667
      %v702 = vmul.f32 %v637, %v669
      %v703 = vmul.f32 %v639, %v671
      %720 = vrot.lane.b32.xlu0 %v688, 120
      %v721 = vpop.permute.xlu0 %720
      %722 = vrot.lane.b32.xlu0 %v689, 120
      %v723 = vpop.permute.xlu0 %722
      %724 = vrot.lane.b32.xlu0 %v690, 120
      %v725 = vpop.permute.xlu0 %724
      %726 = vrot.lane.b32.xlu0 %v691, 120
      %v727 = vpop.permute.xlu0 %726
      %728 = vrot.lane.b32.xlu0 %v692, 120
      %v729 = vpop.permute.xlu0 %728
      %730 = vrot.lane.b32.xlu0 %v693, 120
      %v731 = vpop.permute.xlu0 %730
      %732 = vrot.lane.b32.xlu0 %v694, 120
      %v733 = vpop.permute.xlu0 %732
      %734 = vrot.lane.b32.xlu0 %v695, 120
      %v735 = vpop.permute.xlu0 %734
      %736 = vrot.lane.b32.xlu0 %v696, 120
      %v737 = vpop.permute.xlu0 %736
      %738 = vrot.lane.b32.xlu0 %v697, 120
      %v739 = vpop.permute.xlu0 %738
      %740 = vrot.lane.b32.xlu0 %v698, 120
      %v741 = vpop.permute.xlu0 %740
      %742 = vrot.lane.b32.xlu0 %v699, 120
      %v743 = vpop.permute.xlu0 %742
      %744 = vrot.lane.b32.xlu0 %v700, 120
      %v745 = vpop.permute.xlu0 %744
      %746 = vrot.lane.b32.xlu0 %v701, 120
      %v747 = vpop.permute.xlu0 %746
      %748 = vrot.lane.b32.xlu0 %v702, 120
      %v749 = vpop.permute.xlu0 %748
      %750 = vrot.lane.b32.xlu0 %v703, 120
      %v751 = vpop.permute.xlu0 %750
      %v768 = vadd.f32 %v514, %v721
      %v769 = vadd.f32 %v519, %v723
      %v770 = vadd.f32 %v524, %v725
      %v771 = vadd.f32 %v529, %v727
      %v772 = vadd.f32 %v534, %v729
      %v773 = vadd.f32 %v539, %v731
      %v774 = vadd.f32 %v544, %v733
      %v775 = vadd.f32 %v549, %v735
      %v776 = vadd.f32 %v554, %v737
      %v777 = vadd.f32 %v559, %v739
      %v778 = vadd.f32 %v564, %v741
      %v779 = vadd.f32 %v569, %v743
      %v780 = vadd.f32 %v574, %v745
      %v781 = vadd.f32 %v579, %v747
      %v782 = vadd.f32 %v584, %v749
      %v783 = vadd.f32 %v589, %v751
      %v784 = vld [vmem:[%s1 + $0x90] sm:$0xff]
      %v785 = vld [vmem:[%s1 + $0x98] sm:$0xff]
      %v786 = vld [vmem:[%s1 + $0xa0] sm:$0xff]
      %v787 = vld [vmem:[%s1 + $0xa8] sm:$0xff]
      %v788 = vld [vmem:[%s1 + $0xb0] sm:$0xff]
      %v789 = vld [vmem:[%s1 + $0xb8] sm:$0xff]
      %v790 = vld [vmem:[%s1 + $0xc0] sm:$0xff]
      %v791 = vld [vmem:[%s1 + $0xc8] sm:$0xff]
      %v792 = vld [vmem:[%s1 + $0xd0] sm:$0xff]
      %v793 = vld [vmem:[%s1 + $0xd8] sm:$0x1]
      %vm794 = vcmask 64512
      %v796 = vsel %vm794, %v768, 0
      %v799 = vsel %vm794, %v769, 0
      %v802 = vsel %vm794, %v770, 0
      %v805 = vsel %vm794, %v771, 0
      %v808 = vsel %vm794, %v772, 0
      %v811 = vsel %vm794, %v773, 0
      %v814 = vsel %vm794, %v774, 0
      %v817 = vsel %vm794, %v775, 0
      %v820 = vsel %vm794, %v776, 0
      %v823 = vsel %vm794, %v777, 0
      %v826 = vsel %vm794, %v778, 0
      %v829 = vsel %vm794, %v779, 0
      %v832 = vsel %vm794, %v780, 0
      %v835 = vsel %vm794, %v781, 0
      %v838 = vsel %vm794, %v782, 0
      %v841 = vsel %vm794, %v783, 0
      %843 = vmatprep.subr.mxu0 0.0
      %844 = vmatpush1.msra.mxu0 %v792
      %845 = vmatprep.subr.mxu0 0.0
      %846 = vmatpush1.msra.mxu0 0.0
      %847 = vmatprep.subr.mxu0 0.0
      %848 = vmatpush1.msra.mxu0 0.0
      %849 = vmatprep.subr.mxu0 0.0
      %850 = vmatpush1.msra.mxu0 0.0
      %851 = vmatprep.subr.mxu0 0.0
      %852 = vmatpush1.msra.mxu0 0.0
      %853 = vmatprep.subr.mxu0 0.0
      %854 = vmatpush1.msra.mxu0 0.0
      %855 = vmatprep.subr.mxu0 0.0
      %856 = vmatpush1.msra.mxu0 0.0
      %857 = vmatprep.subr.mxu0 0.0
      %858 = vmatpush1.msra.mxu0 0.0
      %859 = vmatprep.subr.mxu0 0.0
      %860 = vmatpush1.msra.mxu0 0.0
      %861 = vmatprep.subr.mxu0 0.0
      %862 = vmatpush1.msra.mxu0 0.0
      %863 = vmatprep.subr.mxu0 0.0
      %864 = vmatpush1.msra.mxu0 0.0
      %865 = vmatprep.subr.mxu0 0.0
      %866 = vmatpush1.msra.mxu0 0.0
      %867 = vmatprep.subr.mxu0 0.0
      %868 = vmatpush1.msra.mxu0 0.0
      %869 = vmatprep.subr.mxu0 0.0
      %870 = vmatpush1.msra.mxu0 0.0
      %871 = vmatprep.subr.mxu0 0.0
      %872 = vmatpush1.msra.mxu0 0.0
      %873 = vmatprep.subr.mxu0 0.0
      %874 = vmatpush1.msra.mxu0 0.0
      %875 = vmatprep.subr.mxu0 0.0
      %876 = vmatpush1.msra.mxu0 0.0
      %877 = vmatprep.subr.mxu0 0.0
      %878 = vmatpush1.msra.mxu0 0.0
      %879 = vmatprep.subr.mxu0 0.0
      %880 = vmatpush1.msra.mxu0 0.0
      %881 = vmatprep.subr.mxu0 0.0
      %882 = vmatpush1.msra.mxu0 0.0
      %883 = vmatprep.subr.mxu0 0.0
      %884 = vmatpush1.msra.mxu0 0.0
      %885 = vmatprep.subr.mxu0 0.0
      %886 = vmatpush1.msra.mxu0 0.0
      %887 = vmatprep.subr.mxu0 0.0
      %888 = vmatpush1.msra.mxu0 0.0
      %889 = vmatprep.subr.mxu0 0.0
      %890 = vmatpush1.msra.mxu0 0.0
      %891 = vmatprep.subr.mxu0 0.0
      %892 = vmatpush1.msra.mxu0 0.0
      %893 = vmatprep.subr.mxu0 0.0
      %894 = vmatpush1.msra.mxu0 0.0
      %895 = vmatprep.subr.mxu0 0.0
      %896 = vmatpush1.msra.mxu0 0.0
      %897 = vmatprep.subr.mxu0 0.0
      %898 = vmatpush1.msra.mxu0 0.0
      %899 = vmatprep.subr.mxu0 0.0
      %900 = vmatpush1.msra.mxu0 0.0
      %901 = vmatprep.subr.mxu0 0.0
      %902 = vmatpush1.msra.mxu0 0.0
      %903 = vmatprep.subr.mxu0 0.0
      %904 = vmatpush1.msra.mxu0 0.0
      %905 = vmatprep.subr.mxu0 0.0
      %906 = vmatpush1.msra.mxu0 0.0
      %907 = vmatprep.mubr.f32.mxu0 0.0
      %908 = vmatmul.mubr.f32.gmra.mrb[0].mxu0 %v796
      %v909 = vpop.f32.mrb[0].mxu0
      %v910 = vadd.f32 0.0, %v909
      %v911 = vpop.f32.mrb[0].mxu0
      %912 = vmatprep.mubr.f32.mxu0 0.0
      %913 = vmatmul.mubr.f32.gmra.mrb[0].mxu0 %v799
      %v914 = vpop.f32.mrb[0].mxu0
      %v915 = vadd.f32 0.0, %v914
      %v916 = vpop.f32.mrb[0].mxu0
      %917 = vmatprep.mubr.f32.mxu0 0.0
      %918 = vmatmul.mubr.f32.gmra.mrb[0].mxu0 %v802
      %v919 = vpop.f32.mrb[0].mxu0
      %v920 = vadd.f32 0.0, %v919
      %v921 = vpop.f32.mrb[0].mxu0
      %922 = vmatprep.mubr.f32.mxu0 0.0
      %923 = vmatmul.mubr.f32.gmra.mrb[0].mxu0 %v805
      %v924 = vpop.f32.mrb[0].mxu0
      %v925 = vadd.f32 0.0, %v924
      %v926 = vpop.f32.mrb[0].mxu0
      %927 = vmatprep.mubr.f32.mxu0 0.0
      %928 = vmatmul.mubr.f32.gmra.mrb[0].mxu0 %v808
      %v929 = vpop.f32.mrb[0].mxu0
      %v930 = vadd.f32 0.0, %v929
      %v931 = vpop.f32.mrb[0].mxu0
      %932 = vmatprep.mubr.f32.mxu0 0.0
      %933 = vmatmul.mubr.f32.gmra.mrb[0].mxu0 %v811
      %v934 = vpop.f32.mrb[0].mxu0
      %v935 = vadd.f32 0.0, %v934
      %v936 = vpop.f32.mrb[0].mxu0
      %937 = vmatprep.mubr.f32.mxu0 0.0
      %938 = vmatmul.mubr.f32.gmra.mrb[0].mxu0 %v814
      %v939 = vpop.f32.mrb[0].mxu0
      %v940 = vadd.f32 0.0, %v939
      %v941 = vpop.f32.mrb[0].mxu0
      %942 = vmatprep.mubr.f32.mxu0 0.0
      %943 = vmatmul.mubr.f32.gmra.mrb[0].mxu0 %v817
      %v944 = vpop.f32.mrb[0].mxu0
      %v945 = vadd.f32 0.0, %v944
      %v946 = vpop.f32.mrb[0].mxu0
      %947 = vmatprep.mubr.f32.mxu0 0.0
      %948 = vmatmul.mubr.f32.gmra.mrb[0].mxu0 %v820
      %v949 = vpop.f32.mrb[0].mxu0
      %v950 = vadd.f32 0.0, %v949
      %v951 = vpop.f32.mrb[0].mxu0
      %952 = vmatprep.mubr.f32.mxu0 0.0
      %953 = vmatmul.mubr.f32.gmra.mrb[0].mxu0 %v823
      %v954 = vpop.f32.mrb[0].mxu0
      %v955 = vadd.f32 0.0, %v954
      %v956 = vpop.f32.mrb[0].mxu0
      %957 = vmatprep.mubr.f32.mxu0 0.0
      %958 = vmatmul.mubr.f32.gmra.mrb[0].mxu0 %v826
      %v959 = vpop.f32.mrb[0].mxu0
      %v960 = vadd.f32 0.0, %v959
      %v961 = vpop.f32.mrb[0].mxu0
      %962 = vmatprep.mubr.f32.mxu0 0.0
      %963 = vmatmul.mubr.f32.gmra.mrb[0].mxu0 %v829
      %v964 = vpop.f32.mrb[0].mxu0
      %v965 = vadd.f32 0.0, %v964
      %v966 = vpop.f32.mrb[0].mxu0
      %967 = vmatprep.mubr.f32.mxu0 0.0
      %968 = vmatmul.mubr.f32.gmra.mrb[0].mxu0 %v832
      %v969 = vpop.f32.mrb[0].mxu0
      %v970 = vadd.f32 0.0, %v969
      %v971 = vpop.f32.mrb[0].mxu0
      %972 = vmatprep.mubr.f32.mxu0 0.0
      %973 = vmatmul.mubr.f32.gmra.mrb[0].mxu0 %v835
      %v974 = vpop.f32.mrb[0].mxu0
      %v975 = vadd.f32 0.0, %v974
      %v976 = vpop.f32.mrb[0].mxu0
      %977 = vmatprep.mubr.f32.mxu0 0.0
      %978 = vmatmul.mubr.f32.gmra.mrb[0].mxu0 %v838
      %v979 = vpop.f32.mrb[0].mxu0
      %v980 = vadd.f32 0.0, %v979
      %v981 = vpop.f32.mrb[0].mxu0
      %982 = vmatprep.mubr.f32.mxu0 0.0
      %983 = vmatmul.mubr.f32.gmra.mrb[0].mxu0 %v841
      %v984 = vpop.f32.mrb[0].mxu0
      %v985 = vadd.f32 0.0, %v984
      %v986 = vpop.f32.mrb[0].mxu0
      %987 = vdwg.mxu0
      %988 = vmatprep.subr.mxu0 0.0
      %989 = vmatpush1.msra.mxu0 %v784
      %990 = vmatprep.subr.mxu0 0.0
      %991 = vmatpush1.msra.mxu0 %v785
      %992 = vmatprep.subr.mxu0 0.0
      %993 = vmatpush1.msra.mxu0 %v786
      %994 = vmatprep.subr.mxu0 0.0
      %995 = vmatpush1.msra.mxu0 %v787
      %996 = vmatprep.subr.mxu0 0.0
      %997 = vmatpush1.msra.mxu0 %v788
      %998 = vmatprep.subr.mxu0 0.0
      %999 = vmatpush1.msra.mxu0 %v789
      %1000 = vmatprep.subr.mxu0 0.0
      %1001 = vmatpush1.msra.mxu0 %v790
      %1002 = vmatprep.subr.mxu0 0.0
      %1003 = vmatpush1.msra.mxu0 %v791
      %1004 = vmatprep.subr.mxu0 0.0
      %1005 = vmatpush1.msra.mxu0 0.0
      %1006 = vmatprep.subr.mxu0 0.0
      %1007 = vmatpush1.msra.mxu0 0.0
      %1008 = vmatprep.subr.mxu0 0.0
      %1009 = vmatpush1.msra.mxu0 0.0
      %1010 = vmatprep.subr.mxu0 0.0
      %1011 = vmatpush1.msra.mxu0 0.0
      %1012 = vmatprep.subr.mxu0 0.0
      %1013 = vmatpush1.msra.mxu0 0.0
      %1014 = vmatprep.subr.mxu0 0.0
      %1015 = vmatpush1.msra.mxu0 0.0
      %1016 = vmatprep.subr.mxu0 0.0
      %1017 = vmatpush1.msra.mxu0 0.0
      %1018 = vmatprep.subr.mxu0 0.0
      %1019 = vmatpush1.msra.mxu0 0.0
      %1020 = vmatprep.subr.mxu0 0.0
      %1021 = vmatpush1.msra.mxu0 0.0
      %1022 = vmatprep.subr.mxu0 0.0
      %1023 = vmatpush1.msra.mxu0 0.0
      %1024 = vmatprep.subr.mxu0 0.0
      %1025 = vmatpush1.msra.mxu0 0.0
      %1026 = vmatprep.subr.mxu0 0.0
      %1027 = vmatpush1.msra.mxu0 0.0
      %1028 = vmatprep.subr.mxu0 0.0
      %1029 = vmatpush1.msra.mxu0 0.0
      %1030 = vmatprep.subr.mxu0 0.0
      %1031 = vmatpush1.msra.mxu0 0.0
      %1032 = vmatprep.subr.mxu0 0.0
      %1033 = vmatpush1.msra.mxu0 0.0
      %1034 = vmatprep.subr.mxu0 0.0
      %1035 = vmatpush1.msra.mxu0 0.0
      %1036 = vmatprep.subr.mxu0 0.0
      %1037 = vmatpush1.msra.mxu0 0.0
      %1038 = vmatprep.subr.mxu0 0.0
      %1039 = vmatpush1.msra.mxu0 0.0
      %1040 = vmatprep.subr.mxu0 0.0
      %1041 = vmatpush1.msra.mxu0 0.0
      %1042 = vmatprep.subr.mxu0 0.0
      %1043 = vmatpush1.msra.mxu0 0.0
      %1044 = vmatprep.subr.mxu0 0.0
      %1045 = vmatpush1.msra.mxu0 0.0
      %1046 = vmatprep.subr.mxu0 0.0
      %1047 = vmatpush1.msra.mxu0 0.0
      %1048 = vmatprep.subr.mxu0 0.0
      %1049 = vmatpush1.msra.mxu0 0.0
      %1050 = vmatprep.subr.mxu0 0.0
      %1051 = vmatpush1.msra.mxu0 0.0
      %1052 = vmatprep.mubr.f32.mxu0 0.0
      %1053 = vmatmul.mubr.f32.gmra.mrb[0].mxu0 %v178
      %v1054 = vpop.f32.mrb[0].mxu0
      %v1055 = vadd.f32 %v910, %v1054
      %v1056 = vpop.f32.mrb[0].mxu0
      %1057 = vmatprep.mubr.f32.mxu0 0.0
      %1058 = vmatmul.mubr.f32.gmra.mrb[0].mxu0 %v181
      %v1059 = vpop.f32.mrb[0].mxu0
      %v1060 = vadd.f32 %v915, %v1059
      %v1061 = vpop.f32.mrb[0].mxu0
      %1062 = vmatprep.mubr.f32.mxu0 0.0
      %1063 = vmatmul.mubr.f32.gmra.mrb[0].mxu0 %v184
      %v1064 = vpop.f32.mrb[0].mxu0
      %v1065 = vadd.f32 %v920, %v1064
      %v1066 = vpop.f32.mrb[0].mxu0
      %1067 = vmatprep.mubr.f32.mxu0 0.0
      %1068 = vmatmul.mubr.f32.gmra.mrb[0].mxu0 %v187
      %v1069 = vpop.f32.mrb[0].mxu0
      %v1070 = vadd.f32 %v925, %v1069
      %v1071 = vpop.f32.mrb[0].mxu0
      %1072 = vmatprep.mubr.f32.mxu0 0.0
      %1073 = vmatmul.mubr.f32.gmra.mrb[0].mxu0 %v190
      %v1074 = vpop.f32.mrb[0].mxu0
      %v1075 = vadd.f32 %v930, %v1074
      %v1076 = vpop.f32.mrb[0].mxu0
      %1077 = vmatprep.mubr.f32.mxu0 0.0
      %1078 = vmatmul.mubr.f32.gmra.mrb[0].mxu0 %v193
      %v1079 = vpop.f32.mrb[0].mxu0
      %v1080 = vadd.f32 %v935, %v1079
      %v1081 = vpop.f32.mrb[0].mxu0
      %1082 = vmatprep.mubr.f32.mxu0 0.0
      %1083 = vmatmul.mubr.f32.gmra.mrb[0].mxu0 %v196
      %v1084 = vpop.f32.mrb[0].mxu0
      %v1085 = vadd.f32 %v940, %v1084
      %v1086 = vpop.f32.mrb[0].mxu0
      %1087 = vmatprep.mubr.f32.mxu0 0.0
      %1088 = vmatmul.mubr.f32.gmra.mrb[0].mxu0 %v199
      %v1089 = vpop.f32.mrb[0].mxu0
      %v1090 = vadd.f32 %v945, %v1089
      %v1091 = vpop.f32.mrb[0].mxu0
      %1092 = vmatprep.mubr.f32.mxu0 0.0
      %1093 = vmatmul.mubr.f32.gmra.mrb[0].mxu0 %v202
      %v1094 = vpop.f32.mrb[0].mxu0
      %v1095 = vadd.f32 %v950, %v1094
      %v1096 = vpop.f32.mrb[0].mxu0
      %1097 = vmatprep.mubr.f32.mxu0 0.0
      %1098 = vmatmul.mubr.f32.gmra.mrb[0].mxu0 %v205
      %v1099 = vpop.f32.mrb[0].mxu0
      %v1100 = vadd.f32 %v955, %v1099
      %v1101 = vpop.f32.mrb[0].mxu0
      %1102 = vmatprep.mubr.f32.mxu0 0.0
      %1103 = vmatmul.mubr.f32.gmra.mrb[0].mxu0 %v208
      %v1104 = vpop.f32.mrb[0].mxu0
      %v1105 = vadd.f32 %v960, %v1104
      %v1106 = vpop.f32.mrb[0].mxu0
      %1107 = vmatprep.mubr.f32.mxu0 0.0
      %1108 = vmatmul.mubr.f32.gmra.mrb[0].mxu0 %v211
      %v1109 = vpop.f32.mrb[0].mxu0
      %v1110 = vadd.f32 %v965, %v1109
      %v1111 = vpop.f32.mrb[0].mxu0
      %1112 = vmatprep.mubr.f32.mxu0 0.0
      %1113 = vmatmul.mubr.f32.gmra.mrb[0].mxu0 %v214
      %v1114 = vpop.f32.mrb[0].mxu0
      %v1115 = vadd.f32 %v970, %v1114
      %v1116 = vpop.f32.mrb[0].mxu0
      %1117 = vmatprep.mubr.f32.mxu0 0.0
      %1118 = vmatmul.mubr.f32.gmra.mrb[0].mxu0 %v217
      %v1119 = vpop.f32.mrb[0].mxu0
      %v1120 = vadd.f32 %v975, %v1119
      %v1121 = vpop.f32.mrb[0].mxu0
      %1122 = vmatprep.mubr.f32.mxu0 0.0
      %1123 = vmatmul.mubr.f32.gmra.mrb[0].mxu0 %v220
      %v1124 = vpop.f32.mrb[0].mxu0
      %v1125 = vadd.f32 %v980, %v1124
      %v1126 = vpop.f32.mrb[0].mxu0
      %1127 = vmatprep.mubr.f32.mxu0 0.0
      %1128 = vmatmul.mubr.f32.gmra.mrb[0].mxu0 %v223
      %v1129 = vpop.f32.mrb[0].mxu0
      %v1130 = vadd.f32 %v985, %v1129
      %v1131 = vpop.f32.mrb[0].mxu0
      %1132 = vdwg.mxu0
      %v1133 = vlaneseq
      %v1134 = vshrl.u32 %v1133, 7
      %v1135 = vsub.s32 0, %v1134
      %v1136 = vrot.slane %v793, %v1135
      %v1137 = vadd.f32 %v1055, %v1136
      %v1138 = vadd.f32 %v1060, %v1136
      %v1139 = vadd.f32 %v1065, %v1136
      %v1140 = vadd.f32 %v1070, %v1136
      %v1141 = vadd.f32 %v1075, %v1136
      %v1142 = vadd.f32 %v1080, %v1136
      %v1143 = vadd.f32 %v1085, %v1136
      %v1144 = vadd.f32 %v1090, %v1136
      %v1145 = vadd.f32 %v1095, %v1136
      %v1146 = vadd.f32 %v1100, %v1136
      %v1147 = vadd.f32 %v1105, %v1136
      %v1148 = vadd.f32 %v1110, %v1136
      %v1149 = vadd.f32 %v1115, %v1136
      %v1150 = vadd.f32 %v1120, %v1136
      %v1151 = vadd.f32 %v1125, %v1136
      %v1152 = vadd.f32 %v1130, %v1136
      %v1153 = vmax.f32 %v1137, 0.0
      %v1154 = vmax.f32 %v1138, 0.0
      %v1155 = vmax.f32 %v1139, 0.0
      %v1156 = vmax.f32 %v1140, 0.0
      %v1157 = vmax.f32 %v1141, 0.0
      %v1158 = vmax.f32 %v1142, 0.0
      %v1159 = vmax.f32 %v1143, 0.0
      %v1160 = vmax.f32 %v1144, 0.0
      %v1161 = vmax.f32 %v1145, 0.0
      %v1162 = vmax.f32 %v1146, 0.0
      %v1163 = vmax.f32 %v1147, 0.0
      %v1164 = vmax.f32 %v1148, 0.0
      %v1165 = vmax.f32 %v1149, 0.0
      %v1166 = vmax.f32 %v1150, 0.0
      %v1167 = vmax.f32 %v1151, 0.0
      %v1168 = vmax.f32 %v1152, 0.0
      %v1169 = vld [vmem:[%s1 + $0xe0] sm:$0xff]
      %v1170 = vld [vmem:[%s1 + $0xe8] sm:$0xff]
      %v1171 = vld [vmem:[%s1 + $0xf0] sm:$0xff]
      %v1172 = vld [vmem:[%s1 + $0xf8] sm:$0xff]
      %v1173 = vld [vmem:[%s1 + $0x100] sm:$0xff]
      %v1174 = vld [vmem:[%s1 + $0x108] sm:$0xff]
      %v1175 = vld [vmem:[%s1 + $0x110] sm:$0xff]
      %v1176 = vld [vmem:[%s1 + $0x118] sm:$0xff]
      %v1177 = vld [vmem:[%s1 + $0x120] sm:$0x1]
      %v1178 = vlaneseq
      %v1179 = vshrl.u32 %v1178, 7
      %v1180 = vsub.s32 0, %v1179
      %v1181 = vrot.slane %v1177, %v1180
      %v1183 = vsel %vm176, %v1153, 0
      %v1186 = vsel %vm176, %v1154, 0
      %v1189 = vsel %vm176, %v1155, 0
      %v1192 = vsel %vm176, %v1156, 0
      %v1195 = vsel %vm176, %v1157, 0
      %v1198 = vsel %vm176, %v1158, 0
      %v1201 = vsel %vm176, %v1159, 0
      %v1204 = vsel %vm176, %v1160, 0
      %v1207 = vsel %vm176, %v1161, 0
      %v1210 = vsel %vm176, %v1162, 0
      %v1213 = vsel %vm176, %v1163, 0
      %v1216 = vsel %vm176, %v1164, 0
      %v1219 = vsel %vm176, %v1165, 0
      %v1222 = vsel %vm176, %v1166, 0
      %v1225 = vsel %vm176, %v1167, 0
      %v1228 = vsel %vm176, %v1168, 0
      %1230 = vmatprep.subr.mxu0 0.0
      %1231 = vmatpush1.msra.mxu0 %v1169
      %1232 = vmatprep.subr.mxu0 0.0
      %1233 = vmatpush1.msra.mxu0 %v1170
      %1234 = vmatprep.subr.mxu0 0.0
      %1235 = vmatpush1.msra.mxu0 %v1171
      %1236 = vmatprep.subr.mxu0 0.0
      %1237 = vmatpush1.msra.mxu0 %v1172
      %1238 = vmatprep.subr.mxu0 0.0
      %1239 = vmatpush1.msra.mxu0 %v1173
      %1240 = vmatprep.subr.mxu0 0.0
      %1241 = vmatpush1.msra.mxu0 %v1174
      %1242 = vmatprep.subr.mxu0 0.0
      %1243 = vmatpush1.msra.mxu0 %v1175
      %1244 = vmatprep.subr.mxu0 0.0
      %1245 = vmatpush1.msra.mxu0 %v1176
      %1246 = vmatprep.subr.mxu0 0.0
      %1247 = vmatpush1.msra.mxu0 0.0
      %1248 = vmatprep.subr.mxu0 0.0
      %1249 = vmatpush1.msra.mxu0 0.0
      %1250 = vmatprep.subr.mxu0 0.0
      %1251 = vmatpush1.msra.mxu0 0.0
      %1252 = vmatprep.subr.mxu0 0.0
      %1253 = vmatpush1.msra.mxu0 0.0
      %1254 = vmatprep.subr.mxu0 0.0
      %1255 = vmatpush1.msra.mxu0 0.0
      %1256 = vmatprep.subr.mxu0 0.0
      %1257 = vmatpush1.msra.mxu0 0.0
      %1258 = vmatprep.subr.mxu0 0.0
      %1259 = vmatpush1.msra.mxu0 0.0
      %1260 = vmatprep.subr.mxu0 0.0
      %1261 = vmatpush1.msra.mxu0 0.0
      %1262 = vmatprep.subr.mxu0 0.0
      %1263 = vmatpush1.msra.mxu0 0.0
      %1264 = vmatprep.subr.mxu0 0.0
      %1265 = vmatpush1.msra.mxu0 0.0
      %1266 = vmatprep.subr.mxu0 0.0
      %1267 = vmatpush1.msra.mxu0 0.0
      %1268 = vmatprep.subr.mxu0 0.0
      %1269 = vmatpush1.msra.mxu0 0.0
      %1270 = vmatprep.subr.mxu0 0.0
      %1271 = vmatpush1.msra.mxu0 0.0
      %1272 = vmatprep.subr.mxu0 0.0
      %1273 = vmatpush1.msra.mxu0 0.0
      %1274 = vmatprep.subr.mxu0 0.0
      %1275 = vmatpush1.msra.mxu0 0.0
      %1276 = vmatprep.subr.mxu0 0.0
      %1277 = vmatpush1.msra.mxu0 0.0
      %1278 = vmatprep.subr.mxu0 0.0
      %1279 = vmatpush1.msra.mxu0 0.0
      %1280 = vmatprep.subr.mxu0 0.0
      %1281 = vmatpush1.msra.mxu0 0.0
      %1282 = vmatprep.subr.mxu0 0.0
      %1283 = vmatpush1.msra.mxu0 0.0
      %1284 = vmatprep.subr.mxu0 0.0
      %1285 = vmatpush1.msra.mxu0 0.0
      %1286 = vmatprep.subr.mxu0 0.0
      %1287 = vmatpush1.msra.mxu0 0.0
      %1288 = vmatprep.subr.mxu0 0.0
      %1289 = vmatpush1.msra.mxu0 0.0
      %1290 = vmatprep.subr.mxu0 0.0
      %1291 = vmatpush1.msra.mxu0 0.0
      %1292 = vmatprep.subr.mxu0 0.0
      %1293 = vmatpush1.msra.mxu0 0.0
      %1294 = vmatprep.mubr.f32.mxu0 0.0
      %1295 = vmatmul.mubr.f32.gmra.mrb[0].mxu0 %v1183
      %v1296 = vpop.f32.mrb[0].mxu0
      %v1297 = vadd.f32 %v1181, %v1296
      %v1298 = vpop.f32.mrb[0].mxu0
      %1299 = vmatprep.mubr.f32.mxu0 0.0
      %1300 = vmatmul.mubr.f32.gmra.mrb[0].mxu0 %v1186
      %v1301 = vpop.f32.mrb[0].mxu0
      %v1302 = vadd.f32 %v1181, %v1301
      %v1303 = vpop.f32.mrb[0].mxu0
      %1304 = vmatprep.mubr.f32.mxu0 0.0
      %1305 = vmatmul.mubr.f32.gmra.mrb[0].mxu0 %v1189
      %v1306 = vpop.f32.mrb[0].mxu0
      %v1307 = vadd.f32 %v1181, %v1306
      %v1308 = vpop.f32.mrb[0].mxu0
      %1309 = vmatprep.mubr.f32.mxu0 0.0
      %1310 = vmatmul.mubr.f32.gmra.mrb[0].mxu0 %v1192
      %v1311 = vpop.f32.mrb[0].mxu0
      %v1312 = vadd.f32 %v1181, %v1311
      %v1313 = vpop.f32.mrb[0].mxu0
      %1314 = vmatprep.mubr.f32.mxu0 0.0
      %1315 = vmatmul.mubr.f32.gmra.mrb[0].mxu0 %v1195
      %v1316 = vpop.f32.mrb[0].mxu0
      %v1317 = vadd.f32 %v1181, %v1316
      %v1318 = vpop.f32.mrb[0].mxu0
      %1319 = vmatprep.mubr.f32.mxu0 0.0
      %1320 = vmatmul.mubr.f32.gmra.mrb[0].mxu0 %v1198
      %v1321 = vpop.f32.mrb[0].mxu0
      %v1322 = vadd.f32 %v1181, %v1321
      %v1323 = vpop.f32.mrb[0].mxu0
      %1324 = vmatprep.mubr.f32.mxu0 0.0
      %1325 = vmatmul.mubr.f32.gmra.mrb[0].mxu0 %v1201
      %v1326 = vpop.f32.mrb[0].mxu0
      %v1327 = vadd.f32 %v1181, %v1326
      %v1328 = vpop.f32.mrb[0].mxu0
      %1329 = vmatprep.mubr.f32.mxu0 0.0
      %1330 = vmatmul.mubr.f32.gmra.mrb[0].mxu0 %v1204
      %v1331 = vpop.f32.mrb[0].mxu0
      %v1332 = vadd.f32 %v1181, %v1331
      %v1333 = vpop.f32.mrb[0].mxu0
      %1334 = vmatprep.mubr.f32.mxu0 0.0
      %1335 = vmatmul.mubr.f32.gmra.mrb[0].mxu0 %v1207
      %v1336 = vpop.f32.mrb[0].mxu0
      %v1337 = vadd.f32 %v1181, %v1336
      %v1338 = vpop.f32.mrb[0].mxu0
      %1339 = vmatprep.mubr.f32.mxu0 0.0
      %1340 = vmatmul.mubr.f32.gmra.mrb[0].mxu0 %v1210
      %v1341 = vpop.f32.mrb[0].mxu0
      %v1342 = vadd.f32 %v1181, %v1341
      %v1343 = vpop.f32.mrb[0].mxu0
      %1344 = vmatprep.mubr.f32.mxu0 0.0
      %1345 = vmatmul.mubr.f32.gmra.mrb[0].mxu0 %v1213
      %v1346 = vpop.f32.mrb[0].mxu0
      %v1347 = vadd.f32 %v1181, %v1346
      %v1348 = vpop.f32.mrb[0].mxu0
      %1349 = vmatprep.mubr.f32.mxu0 0.0
      %1350 = vmatmul.mubr.f32.gmra.mrb[0].mxu0 %v1216
      %v1351 = vpop.f32.mrb[0].mxu0
      %v1352 = vadd.f32 %v1181, %v1351
      %v1353 = vpop.f32.mrb[0].mxu0
      %1354 = vmatprep.mubr.f32.mxu0 0.0
      %1355 = vmatmul.mubr.f32.gmra.mrb[0].mxu0 %v1219
      %v1356 = vpop.f32.mrb[0].mxu0
      %v1357 = vadd.f32 %v1181, %v1356
      %v1358 = vpop.f32.mrb[0].mxu0
      %1359 = vmatprep.mubr.f32.mxu0 0.0
      %1360 = vmatmul.mubr.f32.gmra.mrb[0].mxu0 %v1222
      %v1361 = vpop.f32.mrb[0].mxu0
      %v1362 = vadd.f32 %v1181, %v1361
      %v1363 = vpop.f32.mrb[0].mxu0
      %1364 = vmatprep.mubr.f32.mxu0 0.0
      %1365 = vmatmul.mubr.f32.gmra.mrb[0].mxu0 %v1225
      %v1366 = vpop.f32.mrb[0].mxu0
      %v1367 = vadd.f32 %v1181, %v1366
      %v1368 = vpop.f32.mrb[0].mxu0
      %1369 = vmatprep.mubr.f32.mxu0 0.0
      %1370 = vmatmul.mubr.f32.gmra.mrb[0].mxu0 %v1228
      %v1371 = vpop.f32.mrb[0].mxu0
      %v1372 = vadd.f32 %v1181, %v1371
      %v1373 = vpop.f32.mrb[0].mxu0
      %1374 = vdwg.mxu0
      %vm1375 = vcmask 261120
      %1376 = vst.msk [vmem:[%s145] sm:$0xff] %vm1375, %v1297
      %1377 = vst.msk [vmem:[%s145 + $0x8] sm:$0xff] %vm1375, %v1302
      %1378 = vst.msk [vmem:[%s145 + $0x10] sm:$0xff] %vm1375, %v1307
      %1379 = vst.msk [vmem:[%s145 + $0x18] sm:$0xff] %vm1375, %v1312
      %1380 = vst.msk [vmem:[%s145 + $0x20] sm:$0xff] %vm1375, %v1317
      %1381 = vst.msk [vmem:[%s145 + $0x28] sm:$0xff] %vm1375, %v1322
      %1382 = vst.msk [vmem:[%s145 + $0x30] sm:$0xff] %vm1375, %v1327
      %1383 = vst.msk [vmem:[%s145 + $0x38] sm:$0xff] %vm1375, %v1332
      %1384 = vst.msk [vmem:[%s145 + $0x40] sm:$0xff] %vm1375, %v1337
      %1385 = vst.msk [vmem:[%s145 + $0x48] sm:$0xff] %vm1375, %v1342
      %1386 = vst.msk [vmem:[%s145 + $0x50] sm:$0xff] %vm1375, %v1347
      %1387 = vst.msk [vmem:[%s145 + $0x58] sm:$0xff] %vm1375, %v1352
      %1388 = vst.msk [vmem:[%s145 + $0x60] sm:$0xff] %vm1375, %v1357
      %1389 = vst.msk [vmem:[%s145 + $0x68] sm:$0xff] %vm1375, %v1362
      %1390 = vst.msk [vmem:[%s145 + $0x70] sm:$0xff] %vm1375, %v1367
      %1391 = vst.msk [vmem:[%s145 + $0x78] sm:$0xff] %vm1375, %v1372
      %1408 = vrot.lane.b32.xlu0 %v514, 32
      %v1409 = vpop.permute.xlu0 %1408
      %1410 = vrot.lane.b32.xlu0 %v519, 32
      %v1411 = vpop.permute.xlu0 %1410
      %1412 = vrot.lane.b32.xlu0 %v524, 32
      %v1413 = vpop.permute.xlu0 %1412
      %1414 = vrot.lane.b32.xlu0 %v529, 32
      %v1415 = vpop.permute.xlu0 %1414
      %1416 = vrot.lane.b32.xlu0 %v534, 32
      %v1417 = vpop.permute.xlu0 %1416
      %1418 = vrot.lane.b32.xlu0 %v539, 32
      %v1419 = vpop.permute.xlu0 %1418
      %1420 = vrot.lane.b32.xlu0 %v544, 32
      %v1421 = vpop.permute.xlu0 %1420
      %1422 = vrot.lane.b32.xlu0 %v549, 32
      %v1423 = vpop.permute.xlu0 %1422
      %1424 = vrot.lane.b32.xlu0 %v554, 32
      %v1425 = vpop.permute.xlu0 %1424
      %1426 = vrot.lane.b32.xlu0 %v559, 32
      %v1427 = vpop.permute.xlu0 %1426
      %1428 = vrot.lane.b32.xlu0 %v564, 32
      %v1429 = vpop.permute.xlu0 %1428
      %1430 = vrot.lane.b32.xlu0 %v569, 32
      %v1431 = vpop.permute.xlu0 %1430
      %1432 = vrot.lane.b32.xlu0 %v574, 32
      %v1433 = vpop.permute.xlu0 %1432
      %1434 = vrot.lane.b32.xlu0 %v579, 32
      %v1435 = vpop.permute.xlu0 %1434
      %1436 = vrot.lane.b32.xlu0 %v584, 32
      %v1437 = vpop.permute.xlu0 %1436
      %1438 = vrot.lane.b32.xlu0 %v589, 32
      %v1439 = vpop.permute.xlu0 %1438
      %vm1456 = vcmask 326912
      %1457 = vst.msk [vmem:[%s145] sm:$0xff] %vm1456, %v1409
      %1458 = vst.msk [vmem:[%s145 + $0x8] sm:$0xff] %vm1456, %v1411
      %1459 = vst.msk [vmem:[%s145 + $0x10] sm:$0xff] %vm1456, %v1413
      %1460 = vst.msk [vmem:[%s145 + $0x18] sm:$0xff] %vm1456, %v1415
      %1461 = vst.msk [vmem:[%s145 + $0x20] sm:$0xff] %vm1456, %v1417
      %1462 = vst.msk [vmem:[%s145 + $0x28] sm:$0xff] %vm1456, %v1419
      %1463 = vst.msk [vmem:[%s145 + $0x30] sm:$0xff] %vm1456, %v1421
      %1464 = vst.msk [vmem:[%s145 + $0x38] sm:$0xff] %vm1456, %v1423
      %1465 = vst.msk [vmem:[%s145 + $0x40] sm:$0xff] %vm1456, %v1425
      %1466 = vst.msk [vmem:[%s145 + $0x48] sm:$0xff] %vm1456, %v1427
      %1467 = vst.msk [vmem:[%s145 + $0x50] sm:$0xff] %vm1456, %v1429
      %1468 = vst.msk [vmem:[%s145 + $0x58] sm:$0xff] %vm1456, %v1431
      %1469 = vst.msk [vmem:[%s145 + $0x60] sm:$0xff] %vm1456, %v1433
      %1470 = vst.msk [vmem:[%s145 + $0x68] sm:$0xff] %vm1456, %v1435
      %1471 = vst.msk [vmem:[%s145 + $0x70] sm:$0xff] %vm1456, %v1437
      %1472 = vst.msk [vmem:[%s145 + $0x78] sm:$0xff] %vm1456, %v1439
      %vm1473 = vcmask 392512
      %1474 = vst.msk [vmem:[%s145] sm:$0xff] %vm1473, %v1409
      %1475 = vst.msk [vmem:[%s145 + $0x8] sm:$0xff] %vm1473, %v1411
      %1476 = vst.msk [vmem:[%s145 + $0x10] sm:$0xff] %vm1473, %v1413
      %1477 = vst.msk [vmem:[%s145 + $0x18] sm:$0xff] %vm1473, %v1415
      %1478 = vst.msk [vmem:[%s145 + $0x20] sm:$0xff] %vm1473, %v1417
      %1479 = vst.msk [vmem:[%s145 + $0x28] sm:$0xff] %vm1473, %v1419
      %1480 = vst.msk [vmem:[%s145 + $0x30] sm:$0xff] %vm1473, %v1421
      %1481 = vst.msk [vmem:[%s145 + $0x38] sm:$0xff] %vm1473, %v1423
      %1482 = vst.msk [vmem:[%s145 + $0x40] sm:$0xff] %vm1473, %v1425
      %1483 = vst.msk [vmem:[%s145 + $0x48] sm:$0xff] %vm1473, %v1427
      %1484 = vst.msk [vmem:[%s145 + $0x50] sm:$0xff] %vm1473, %v1429
      %1485 = vst.msk [vmem:[%s145 + $0x58] sm:$0xff] %vm1473, %v1431
      %1486 = vst.msk [vmem:[%s145 + $0x60] sm:$0xff] %vm1473, %v1433
      %1487 = vst.msk [vmem:[%s145 + $0x68] sm:$0xff] %vm1473, %v1435
      %1488 = vst.msk [vmem:[%s145 + $0x70] sm:$0xff] %vm1473, %v1437
      %1489 = vst.msk [vmem:[%s145 + $0x78] sm:$0xff] %vm1473, %v1439
      %s1490 = smul.u32 16, %s13
      %p1491 = scmp.lt.s32.totalorder %s1490, 31
      %s1492 = scalar_select %p1491, %s1490, 31
      %s1493 = smul.addr %s1492, 8
      %s1494 = scalar_lea.vmem %s2, %s1493
      // Predicated region
      $region29: #{tpu_custom_call.1} parent=27 // pred_check
        %p1495 = pneg %p78
      $region30: #{tpu_custom_call.1} parent=27 // pred_check_branch
        %1497 = sbr.rel (%p1495) target = $region32
      $region31: #{tpu_custom_call.1} parent=27 // pred_region
        %s1498 = smul.u32 16, %s13
      $region32: #{tpu_custom_call.1} parent=27 // pred_fallthru
        _
    $region28: #{tpu_custom_call.1} parent=5 // pred_fallthru
      _
    %p1499 = scmp.le.s32.totalorder 2, %s8
    // Predicated region
    $region33: #{tpu_custom_call.1} parent=5 // pred_check
      %p1500 = pneg %p1499
    $region34: #{tpu_custom_call.1} parent=5 // pred_check_branch
      %1502 = sbr.rel (%p1500) target = $region36
    $region35: #{tpu_custom_call.1} parent=5 // pred_region
      %s1503 = ssub.s32 %s8, 2
      // Predicated region
      $region37: #{tpu_custom_call.1} parent=35 // pred_check
        %p1504 = pneg %p84
      $region38: #{tpu_custom_call.1} parent=35 // pred_check_branch
        %1506 = sbr.rel (%p1504) target = $region40
      $region39: #{tpu_custom_call.1} parent=35 // pred_region
        %s1507 = smul.u32 16, %s14
        %p1508 = scmp.lt.s32.totalorder %s1507, 31
        %s1509 = scalar_select %p1508, %s1507, 31
        %s1510 = smul.addr %s1509, 8
        %s1511 = scalar_lea.vmem %s2, %s1510
      $region40: #{tpu_custom_call.1} parent=35 // pred_fallthru
        _
    $region36: #{tpu_custom_call.1} parent=5 // pred_fallthru
      _
  $region6: #{tpu_custom_call.1} parent=0 // loop_footer
    %s12 = sadd.s32 1, %s8
  $region7: #{tpu_custom_call.1} parent=0 // loop_footer_branch
    %7 = sbr.rel target = $region3
  $region8: #{tpu_custom_call.1} parent=0 // loop_exit
    _

</llo_original>
